<compile_context>
chip_gen: v5e
topology: v5e:2x2
jax: 0.10.0
libtpu: 0.0.40
codegen_flags: <defaults>
</compile_context>

<pallas_src>
import functools

import jax
import jax.numpy as jnp
from jax.experimental import pallas as pl
from jax.experimental.pallas import tpu as pltpu


# ----------------------------- helpers ---------------------------------------
def _round_up(x, m):
    return (x + m - 1) // m * m


def _choose_tm(M, K, Np, has_residual):
    """Pick an M tile: multiple of 8, VMEM-safe, >= 2 grid steps when possible."""
    # Double-buffered bytes per tile row: bf16 patches + f32 out (+ f32 residual).
    per_row = 2 * K * 2 + 2 * Np * 4 + (2 * Np * 4 if has_residual else 0)
    budget = 12 * 1024 * 1024 - 2 * K * Np * 2       # leave room for resident weight
    cap = max(8, min(1024, (budget // max(per_row, 1)) // 8 * 8))
    if M <= 8:
        return 8
    n_blocks = max(2, -(-M // cap))                  # >= 2 so v7x uses both TCs
    return max(8, min(cap, _round_up(-(-M // n_blocks), 8)))


# ----------------------------- Pallas kernel ----------------------------------
def _fused_matmul_kernel(*refs, add_residual, apply_relu):
    if add_residual:
        x_ref, w_ref, b_ref, r_ref, o_ref = refs
    else:
        x_ref, w_ref, b_ref, o_ref = refs
    acc = jnp.dot(x_ref[...], w_ref[...], preferred_element_type=jnp.float32)
    acc = acc + b_ref[...]                            # folded-BN bias (f32)
    if add_residual:
        acc = acc + r_ref[...]
    if apply_relu:
        acc = jnp.maximum(acc, 0.0)
    o_ref[...] = acc.astype(o_ref.dtype)


def fused_conv_matmul(patches, w_mat, scale, bias, residual=None, relu=True):
    """(M, K) @ (K, Nout) with fused BN bias / residual / ReLU.

    BN scale is folded into the weight columns; operands go in as bf16, the
    accumulator/epilogue are f32.  Output lane dim is padded to 128 and the
    padding is sliced off before returning (M, Nout) f32.
    """
    M, K = patches.shape
    Nout = w_mat.shape[1]
    Np = _round_up(Nout, 128)                         # lane-dense output stores

    w_f32 = w_mat.astype(jnp.float32) * scale.astype(jnp.float32)[None, :]
    w_p = jnp.pad(w_f32.astype(jnp.bfloat16), ((0, 0), (0, Np - Nout)))
    b_p = jnp.pad(bias.astype(jnp.float32)[None, :], ((0, 0), (0, Np - Nout)))

    TM = _choose_tm(M, K, Np, residual is not None)
    grid = (pl.cdiv(M, TM),)

    args = [patches.astype(jnp.bfloat16), w_p, b_p]
    in_specs = [
        pl.BlockSpec((TM, K), lambda i: (i, 0)),      # patches tile
        pl.BlockSpec((K, Np), lambda i: (0, 0)),      # weights (stay resident)
        pl.BlockSpec((1, Np), lambda i: (0, 0)),      # bias   (stays resident)
    ]
    if residual is not None:
        res = residual.astype(jnp.float32)
        if Np != Nout:
            res = jnp.pad(res, ((0, 0), (0, Np - Nout)))
        args.append(res)
        in_specs.append(pl.BlockSpec((TM, Np), lambda i: (i, 0)))

    kernel = functools.partial(_fused_matmul_kernel,
                               add_residual=residual is not None,
                               apply_relu=relu)
    out = pl.pallas_call(
        kernel,
        out_shape=jax.ShapeDtypeStruct((M, Np), jnp.float32),
        grid=grid,
        in_specs=in_specs,
        out_specs=pl.BlockSpec((TM, Np), lambda i: (i, 0)),
        compiler_params=pltpu.CompilerParams(dimension_semantics=("parallel",)),
    )(*args)
    return out[:, :Nout]


# ----------------------------- JAX glue (NDHWC) -------------------------------
def _extract_patches(xp, ksize, stride):
    """xp: (N, Dp, Hp, Wp, C) already padded.  K ordering is (kd, kh, kw, c)."""
    N, Dp, Hp, Wp, C = xp.shape
    Do = (Dp - ksize) // stride + 1
    Ho = (Hp - ksize) // stride + 1
    Wo = (Wp - ksize) // stride + 1
    taps = []
    for kd in range(ksize):
        for kh in range(ksize):
            for kw in range(ksize):
                taps.append(xp[:, kd:kd + (Do - 1) * stride + 1:stride,
                               kh:kh + (Ho - 1) * stride + 1:stride,
                               kw:kw + (Wo - 1) * stride + 1:stride, :])
    p = jnp.stack(taps, axis=4)                       # (N, Do, Ho, Wo, k^3, C)
    return p.reshape(N * Do * Ho * Wo, ksize ** 3 * C), (N, Do, Ho, Wo)


def conv3d_bn(x, w, scale, bias, stride, residual=None, relu=True):
    """Conv3d(k=3, pad=1, stride) + BN (+residual) (+ReLU).  x: NDHWC f32."""
    Cout, Cin = w.shape[0], w.shape[1]
    xp = jnp.pad(x.astype(jnp.bfloat16),
                 ((0, 0), (1, 1), (1, 1), (1, 1), (0, 0)))
    patches, (N, Do, Ho, Wo) = _extract_patches(xp, 3, stride)
    # (Cout, Cin, kd, kh, kw) -> (kd, kh, kw, Cin, Cout) -> (27*Cin, Cout)
    w_mat = w.transpose(2, 3, 4, 1, 0).reshape(27 * Cin, Cout)
    res_flat = None if residual is None else residual.reshape(-1, Cout)
    out = fused_conv_matmul(patches, w_mat, scale, bias, res_flat, relu)
    return out.reshape(N, Do, Ho, Wo, Cout)


def deconv3d_bn(x, w_t, scale, bias, residual=None, relu=True):
    """ConvTranspose3d(k=3, pad=1, out_pad=1, stride=2) + BN (+res) (+ReLU).

    Sub-pixel decomposition (exact): per output dim, phase p at index 2m+p is
        p=0:  x[m]   * w[k=1]
        p=1:  x[m]   * w[k=2]  +  x[m+1] * w[k=0]       (x[D] := 0)
    so the whole deconv is a stride-1 2x2x2 conv from Cin to 8*Cout followed
    by a pixel shuffle.  x: NDHWC f32; w_t: (Cin, Cout, 3, 3, 3).
    """
    N, D, H, W, Cin = x.shape
    Cout = w_t.shape[1]

    tap = {(0, 0): 1, (1, 0): 2, (1, 1): 0}           # (phase, delta) -> tap
    w2 = jnp.zeros((2, 2, 2, Cin, 8, Cout), w_t.dtype)
    for pd in range(2):
        for ph in range(2):
            for pw in range(2):
                p_idx = pd * 4 + ph * 2 + pw
                for dd in range(2):
                    kd = tap.get((pd, dd))
                    if kd is None:
                        continue
                    for dh in range(2):
                        kh = tap.get((ph, dh))
                        if kh is None:
                            continue
                        for dw in range(2):
                            kw = tap.get((pw, dw))
                            if kw is None:
                                continue
                            w2 = w2.at[dd, dh, dw, :, p_idx, :].set(
                                w_t[:, :, kd, kh, kw])
    w2_mat = w2.reshape(8 * Cin, 8 * Cout)            # K order (dd, dh, dw, ci)

    xp = jnp.pad(x.astype(jnp.bfloat16),
                 ((0, 0), (0, 1), (0, 1), (0, 1), (0, 0)))
    patches, _ = _extract_patches(xp, 2, 1)           # (N*D*H*W, 8*Cin)

    scale_rep = jnp.tile(scale, 8)                    # column = p_idx*Cout + co
    bias_rep = jnp.tile(bias, 8)

    res_flat = None
    if residual is not None:                          # (N, 2D, 2H, 2W, Cout)
        r = residual.reshape(N, D, 2, H, 2, W, 2, Cout)
        r = r.transpose(0, 1, 3, 5, 2, 4, 6, 7)       # (N, D, H, W, pd, ph, pw, C)
        res_flat = r.reshape(N * D * H * W, 8 * Cout)

    out = fused_conv_matmul(patches, w2_mat, scale_rep, bias_rep,
                            res_flat, relu)           # (M, 8*Cout)
    out = out.reshape(N, D, H, W, 2, 2, 2, Cout)
    out = out.transpose(0, 1, 4, 2, 5, 3, 6, 7)       # (N, D, pd, H, ph, W, pw, C)
    return out.reshape(N, 2 * D, 2 * H, 2 * W, Cout)


# ----------------------------- Parameters ------------------------------------
def init_params(key, inplanes):
    C = inplanes
    ks = jax.random.split(key, 12)

    def conv_w(k, cout, cin):
        return jax.random.normal(k, (cout, cin, 3, 3, 3), jnp.float32) / jnp.sqrt(cin * 27.0)

    def deconv_w(k, cin, cout):
        # PyTorch ConvTranspose3d weight layout: (in_channels, out_channels, kD, kH, kW)
        return jax.random.normal(k, (cin, cout, 3, 3, 3), jnp.float32) / jnp.sqrt(cin * 27.0)

    def bn(k, c):
        k1, k2, k3, k4 = jax.random.split(k, 4)
        gamma = 1.0 + 0.1 * jax.random.normal(k1, (c,), jnp.float32)
        beta = 0.1 * jax.random.normal(k2, (c,), jnp.float32)
        mean = 0.1 * jax.random.normal(k3, (c,), jnp.float32)
        var = 1.0 + 0.1 * jax.random.uniform(k4, (c,), jnp.float32)
        scale = gamma / jnp.sqrt(var + 1e-5)
        bias = beta - mean * scale
        return scale, bias

    p = {}
    p["w1"] = conv_w(ks[0], 2 * C, C);        p["s1"], p["b1"] = bn(ks[1], 2 * C)
    p["w2"] = conv_w(ks[2], 2 * C, 2 * C);    p["s2"], p["b2"] = bn(ks[3], 2 * C)
    p["w3"] = conv_w(ks[4], 2 * C, 2 * C);    p["s3"], p["b3"] = bn(ks[5], 2 * C)
    p["w4"] = conv_w(ks[6], 2 * C, 2 * C);    p["s4"], p["b4"] = bn(ks[7], 2 * C)
    p["w5"] = deconv_w(ks[8], 2 * C, 2 * C);  p["s5"], p["b5"] = bn(ks[9], 2 * C)
    p["w6"] = deconv_w(ks[10], 2 * C, C);     p["s6"], p["b6"] = bn(ks[11], C)
    return p


# ----------------------------- Forward ---------------------------------------
def hourglass_forward(params, x, presqu=None, postsqu=None):
    """x / presqu / postsqu in PyTorch NCDHW layout; internals run NDHWC."""
    p = params
    to_ndhwc = lambda t: None if t is None else jnp.transpose(t, (0, 2, 3, 4, 1))
    to_ncdhw = lambda t: jnp.transpose(t, (0, 4, 1, 2, 3))

    xc = to_ndhwc(x)
    presqu_c = to_ndhwc(presqu)
    postsqu_c = to_ndhwc(postsqu)

    # conv1: convbn_3d(C -> 2C, stride 2) + ReLU
    out = conv3d_bn(xc, p["w1"], p["s1"], p["b1"], stride=2, relu=True)
    # conv2: convbn_3d(2C -> 2C, stride 1); pre = relu(pre + postsqu) or relu(pre)
    pre = conv3d_bn(out, p["w2"], p["s2"], p["b2"], stride=1,
                    residual=postsqu_c, relu=True)
    # conv3 / conv4
    out = conv3d_bn(pre, p["w3"], p["s3"], p["b3"], stride=2, relu=True)
    out = conv3d_bn(out, p["w4"], p["s4"], p["b4"], stride=1, relu=True)
    # conv5 (deconv + BN) + residual (presqu or pre) + ReLU
    skip = presqu_c if presqu_c is not None else pre
    post = deconv3d_bn(out, p["w5"], p["s5"], p["b5"], residual=skip, relu=True)
    # conv6 (deconv + BN), no ReLU
    out = deconv3d_bn(post, p["w6"], p["s6"], p["b6"], residual=None, relu=False)
    return to_ncdhw(out), to_ncdhw(pre), to_ncdhw(post)


# ----------------------------- Pure-JAX reference -----------------------------
def _conv_ref(x, w, scale, bias, stride, residual=None, relu=True):
    out = jax.lax.conv_general_dilated(
        x, w, window_strides=(stride,) * 3, padding=((1, 1),) * 3,
        dimension_numbers=("NCDHW", "OIDHW", "NCDHW"))
    out = out * scale[None, :, None, None, None] + bias[None, :, None, None, None]
    if residual is not None:
        out = out + residual
    if relu:
        out = jnp.maximum(out, 0.0)
    return out


def _deconv_ref(x, w_t, scale, bias, residual=None, relu=True):
    w_eff = jnp.flip(w_t, axis=(2, 3, 4)).transpose(1, 0, 2, 3, 4)
    out = jax.lax.conv_general_dilated(
        x, w_eff, window_strides=(1, 1, 1), padding=((1, 2),) * 3,
        lhs_dilation=(2, 2, 2), dimension_numbers=("NCDHW", "OIDHW", "NCDHW"))
    out = out * scale[None, :, None, None, None] + bias[None, :, None, None, None]
    if residual is not None:
        out = out + residual
    if relu:
        out = jnp.maximum(out, 0.0)
    return out


def hourglass_ref(params, x, presqu=None, postsqu=None):
    p = params
    out = _conv_ref(x, p["w1"], p["s1"], p["b1"], 2, relu=True)
    pre = _conv_ref(out, p["w2"], p["s2"], p["b2"], 1, residual=postsqu, relu=True)
    out = _conv_ref(pre, p["w3"], p["s3"], p["b3"], 2, relu=True)
    out = _conv_ref(out, p["w4"], p["s4"], p["b4"], 1, relu=True)
    skip = presqu if presqu is not None else pre
    post = _deconv_ref(out, p["w5"], p["s5"], p["b5"], residual=skip, relu=True)
    out = _deconv_ref(post, p["w6"], p["s6"], p["b6"], residual=None, relu=False)
    return out, pre, post


if __name__ == "__main__":
    key = jax.random.PRNGKey(0)
    kx, kp = jax.random.split(key)
    C = 4                                                     # inplanes
    x = jax.random.normal(kx, (2, C, 8, 8, 8), jnp.float32)   # NCDHW cost volume
    params = init_params(kp, C)

    fwd = jax.jit(lambda p_, x_: hourglass_forward(p_, x_, None, None))
    out, pre, post = fwd(params, x)
    jax.block_until_ready((out, pre, post))

    assert out.shape == (2, C, 8, 8, 8)
    assert pre.shape == (2, 2 * C, 4, 4, 4)
    assert post.shape == (2, 2 * C, 4, 4, 4)

    # Sanity check vs pure-JAX f32 reference (Pallas path uses bf16 operands
    # with f32 accumulation -> loose tolerance).
    out_r, pre_r, post_r = hourglass_ref(params, x, None, None)
    for got, ref in ((out, out_r), (pre, pre_r), (post, post_r)):
        err = float(jnp.max(jnp.abs(got - ref)))
        assert err < 0.15, f"mismatch vs reference: max abs err {err}"

    print("KERNEL_OK")
</pallas_src>

<mosaic_0001>
module attributes {stable_mosaic.version = 11 : i64} {
  func.func @_fused_matmul_kernel(%arg0: i32, %arg1: memref<64x108xbf16, #tpu.memory_space<vmem>>, %arg2: memref<108x128xbf16, #tpu.memory_space<vmem>>, %arg3: memref<1x128xf32, #tpu.memory_space<vmem>>, %arg4: memref<64x128xf32, #tpu.memory_space<vmem>>) attributes {dimension_semantics = [#tpu.dimension_semantics<parallel>], iteration_bounds = array<i64: 2>, scalar_prefetch = 0 : i64, scratch_operands = 0 : i64, tpu.core_type = #tpu.core_type<tc>, window_params = [{transform_indices = @transform_0, window_bounds = array<i64: 64, 108>}, {pipeline_mode = #tpu.pipeline_mode<synchronous>, transform_indices = @transform_1, window_bounds = array<i64: 108, 128>}, {pipeline_mode = #tpu.pipeline_mode<synchronous>, transform_indices = @transform_2, window_bounds = array<i64: 1, 128>}, {transform_indices = @transform_3, window_bounds = array<i64: 64, 128>}]} {
    %c0 = arith.constant 0 : index
    %c0_0 = arith.constant 0 : index
    %0 = vector.load %arg1[%c0, %c0_0] : memref<64x108xbf16, #tpu.memory_space<vmem>>, vector<64x108xbf16>
    %c0_1 = arith.constant 0 : index
    %c0_2 = arith.constant 0 : index
    %1 = vector.load %arg2[%c0_1, %c0_2] : memref<108x128xbf16, #tpu.memory_space<vmem>>, vector<108x128xbf16>
    %cst = arith.constant dense<0.000000e+00> : vector<64x128xf32>
    %2 = tpu.matmul %0, %1, %cst {dimension_numbers = #tpu.dot_dimension_numbers<[1], [0], [0], [1], [0, 0, 1, 1], [], []>} : vector<64x108xbf16>, vector<108x128xbf16>, vector<64x128xf32> -> vector<64x128xf32>
    %c0_3 = arith.constant 0 : index
    %c0_4 = arith.constant 0 : index
    %3 = vector.load %arg3[%c0_3, %c0_4] : memref<1x128xf32, #tpu.memory_space<vmem>>, vector<1x128xf32>
    %4 = vector.broadcast %3 : vector<1x128xf32> to vector<64x128xf32>
    %5 = arith.addf %2, %4 : vector<64x128xf32>
    %cst_5 = arith.constant 0.000000e+00 : f32
    %6 = vector.broadcast %cst_5 : f32 to vector<64x128xf32>
    %7 = arith.maximumf %5, %6 : vector<64x128xf32>
    %c0_6 = arith.constant 0 : index
    %c0_7 = arith.constant 0 : index
    %8 = vector.load %arg4[%c0_6, %c0_7] : memref<64x128xf32, #tpu.memory_space<vmem>>, vector<64x128xf32>
    tpu.vector_store %arg4[%c0_6, %c0_7], %7 {strides = array<i32>} : memref<64x128xf32, #tpu.memory_space<vmem>>, vector<64x128xf32>,
    return
  }
  func.func @transform_0(%arg0: i32) -> (i32, i32) {
    %c0_i32 = arith.constant 0 : i32
    %c0_i32_0 = arith.constant 0 : i32
    return %arg0, %c0_i32 : i32, i32
  }
  func.func @transform_1(%arg0: i32) -> (i32, i32) {
    %c0_i32 = arith.constant 0 : i32
    %c0_i32_0 = arith.constant 0 : i32
    %c0_i32_1 = arith.constant 0 : i32
    return %c0_i32, %c0_i32_0 : i32, i32
  }
  func.func @transform_2(%arg0: i32) -> (i32, i32) {
    %c0_i32 = arith.constant 0 : i32
    %c0_i32_0 = arith.constant 0 : i32
    %c0_i32_1 = arith.constant 0 : i32
    return %c0_i32, %c0_i32_0 : i32, i32
  }
  func.func @transform_3(%arg0: i32) -> (i32, i32) {
    %c0_i32 = arith.constant 0 : i32
    %c0_i32_0 = arith.constant 0 : i32
    return %arg0, %c0_i32 : i32, i32
  }
}

module attributes {stable_mosaic.version = 11 : i64} {
  func.func @_fused_matmul_kernel(%arg0: i32, %arg1: memref<64x216xbf16, #tpu.memory_space<vmem>>, %arg2: memref<216x128xbf16, #tpu.memory_space<vmem>>, %arg3: memref<1x128xf32, #tpu.memory_space<vmem>>, %arg4: memref<64x128xf32, #tpu.memory_space<vmem>>) attributes {dimension_semantics = [#tpu.dimension_semantics<parallel>], iteration_bounds = array<i64: 2>, scalar_prefetch = 0 : i64, scratch_operands = 0 : i64, tpu.core_type = #tpu.core_type<tc>, window_params = [{transform_indices = @transform_0, window_bounds = array<i64: 64, 216>}, {pipeline_mode = #tpu.pipeline_mode<synchronous>, transform_indices = @transform_1, window_bounds = array<i64: 216, 128>}, {pipeline_mode = #tpu.pipeline_mode<synchronous>, transform_indices = @transform_2, window_bounds = array<i64: 1, 128>}, {transform_indices = @transform_3, window_bounds = array<i64: 64, 128>}]} {
    %c0 = arith.constant 0 : index
    %c0_0 = arith.constant 0 : index
    %0 = vector.load %arg1[%c0, %c0_0] : memref<64x216xbf16, #tpu.memory_space<vmem>>, vector<64x216xbf16>
    %c0_1 = arith.constant 0 : index
    %c0_2 = arith.constant 0 : index
    %1 = vector.load %arg2[%c0_1, %c0_2] : memref<216x128xbf16, #tpu.memory_space<vmem>>, vector<216x128xbf16>
    %cst = arith.constant dense<0.000000e+00> : vector<64x128xf32>
    %2 = tpu.matmul %0, %1, %cst {dimension_numbers = #tpu.dot_dimension_numbers<[1], [0], [0], [1], [0, 0, 1, 1], [], []>} : vector<64x216xbf16>, vector<216x128xbf16>, vector<64x128xf32> -> vector<64x128xf32>
    %c0_3 = arith.constant 0 : index
    %c0_4 = arith.constant 0 : index
    %3 = vector.load %arg3[%c0_3, %c0_4] : memref<1x128xf32, #tpu.memory_space<vmem>>, vector<1x128xf32>
    %4 = vector.broadcast %3 : vector<1x128xf32> to vector<64x128xf32>
    %5 = arith.addf %2, %4 : vector<64x128xf32>
    %cst_5 = arith.constant 0.000000e+00 : f32
    %6 = vector.broadcast %cst_5 : f32 to vector<64x128xf32>
    %7 = arith.maximumf %5, %6 : vector<64x128xf32>
    %c0_6 = arith.constant 0 : index
    %c0_7 = arith.constant 0 : index
    %8 = vector.load %arg4[%c0_6, %c0_7] : memref<64x128xf32, #tpu.memory_space<vmem>>, vector<64x128xf32>
    tpu.vector_store %arg4[%c0_6, %c0_7], %7 {strides = array<i32>} : memref<64x128xf32, #tpu.memory_space<vmem>>, vector<64x128xf32>,
    return
  }
  func.func @transform_0(%arg0: i32) -> (i32, i32) {
    %c0_i32 = arith.constant 0 : i32
    %c0_i32_0 = arith.constant 0 : i32
    return %arg0, %c0_i32 : i32, i32
  }
  func.func @transform_1(%arg0: i32) -> (i32, i32) {
    %c0_i32 = arith.constant 0 : i32
    %c0_i32_0 = arith.constant 0 : i32
    %c0_i32_1 = arith.constant 0 : i32
    return %c0_i32, %c0_i32_0 : i32, i32
  }
  func.func @transform_2(%arg0: i32) -> (i32, i32) {
    %c0_i32 = arith.constant 0 : i32
    %c0_i32_0 = arith.constant 0 : i32
    %c0_i32_1 = arith.constant 0 : i32
    return %c0_i32, %c0_i32_0 : i32, i32
  }
  func.func @transform_3(%arg0: i32) -> (i32, i32) {
    %c0_i32 = arith.constant 0 : i32
    %c0_i32_0 = arith.constant 0 : i32
    return %arg0, %c0_i32 : i32, i32
  }
}

module attributes {stable_mosaic.version = 11 : i64} {
  func.func @_fused_matmul_kernel(%arg0: i32, %arg1: memref<8x216xbf16, #tpu.memory_space<vmem>>, %arg2: memref<216x128xbf16, #tpu.memory_space<vmem>>, %arg3: memref<1x128xf32, #tpu.memory_space<vmem>>, %arg4: memref<8x128xf32, #tpu.memory_space<vmem>>) attributes {dimension_semantics = [#tpu.dimension_semantics<parallel>], iteration_bounds = array<i64: 2>, scalar_prefetch = 0 : i64, scratch_operands = 0 : i64, tpu.core_type = #tpu.core_type<tc>, window_params = [{transform_indices = @transform_0, window_bounds = array<i64: 8, 216>}, {pipeline_mode = #tpu.pipeline_mode<synchronous>, transform_indices = @transform_1, window_bounds = array<i64: 216, 128>}, {pipeline_mode = #tpu.pipeline_mode<synchronous>, transform_indices = @transform_2, window_bounds = array<i64: 1, 128>}, {transform_indices = @transform_3, window_bounds = array<i64: 8, 128>}]} {
    %c0 = arith.constant 0 : index
    %c0_0 = arith.constant 0 : index
    %0 = vector.load %arg1[%c0, %c0_0] : memref<8x216xbf16, #tpu.memory_space<vmem>>, vector<8x216xbf16>
    %c0_1 = arith.constant 0 : index
    %c0_2 = arith.constant 0 : index
    %1 = vector.load %arg2[%c0_1, %c0_2] : memref<216x128xbf16, #tpu.memory_space<vmem>>, vector<216x128xbf16>
    %cst = arith.constant dense<0.000000e+00> : vector<8x128xf32>
    %2 = tpu.matmul %0, %1, %cst {dimension_numbers = #tpu.dot_dimension_numbers<[1], [0], [0], [1], [0, 0, 1, 1], [], []>} : vector<8x216xbf16>, vector<216x128xbf16>, vector<8x128xf32> -> vector<8x128xf32>
    %c0_3 = arith.constant 0 : index
    %c0_4 = arith.constant 0 : index
    %3 = vector.load %arg3[%c0_3, %c0_4] : memref<1x128xf32, #tpu.memory_space<vmem>>, vector<1x128xf32>
    %4 = vector.broadcast %3 : vector<1x128xf32> to vector<8x128xf32>
    %5 = arith.addf %2, %4 : vector<8x128xf32>
    %cst_5 = arith.constant 0.000000e+00 : f32
    %6 = vector.broadcast %cst_5 : f32 to vector<8x128xf32>
    %7 = arith.maximumf %5, %6 : vector<8x128xf32>
    %c0_6 = arith.constant 0 : index
    %c0_7 = arith.constant 0 : index
    %8 = vector.load %arg4[%c0_6, %c0_7] : memref<8x128xf32, #tpu.memory_space<vmem>>, vector<8x128xf32>
    tpu.vector_store %arg4[%c0_6, %c0_7], %7 {strides = array<i32>} : memref<8x128xf32, #tpu.memory_space<vmem>>, vector<8x128xf32>,
    return
  }
  func.func @transform_0(%arg0: i32) -> (i32, i32) {
    %c0_i32 = arith.constant 0 : i32
    %c0_i32_0 = arith.constant 0 : i32
    return %arg0, %c0_i32 : i32, i32
  }
  func.func @transform_1(%arg0: i32) -> (i32, i32) {
    %c0_i32 = arith.constant 0 : i32
    %c0_i32_0 = arith.constant 0 : i32
    %c0_i32_1 = arith.constant 0 : i32
    return %c0_i32, %c0_i32_0 : i32, i32
  }
  func.func @transform_2(%arg0: i32) -> (i32, i32) {
    %c0_i32 = arith.constant 0 : i32
    %c0_i32_0 = arith.constant 0 : i32
    %c0_i32_1 = arith.constant 0 : i32
    return %c0_i32, %c0_i32_0 : i32, i32
  }
  func.func @transform_3(%arg0: i32) -> (i32, i32) {
    %c0_i32 = arith.constant 0 : i32
    %c0_i32_0 = arith.constant 0 : i32
    return %arg0, %c0_i32 : i32, i32
  }
}

module attributes {stable_mosaic.version = 11 : i64} {
  func.func @_fused_matmul_kernel(%arg0: i32, %arg1: memref<8x64xbf16, #tpu.memory_space<vmem>>, %arg2: memref<64x128xbf16, #tpu.memory_space<vmem>>, %arg3: memref<1x128xf32, #tpu.memory_space<vmem>>, %arg4: memref<8x128xf32, #tpu.memory_space<vmem>>, %arg5: memref<8x128xf32, #tpu.memory_space<vmem>>) attributes {dimension_semantics = [#tpu.dimension_semantics<parallel>], iteration_bounds = array<i64: 2>, scalar_prefetch = 0 : i64, scratch_operands = 0 : i64, tpu.core_type = #tpu.core_type<tc>, window_params = [{transform_indices = @transform_0, window_bounds = array<i64: 8, 64>}, {pipeline_mode = #tpu.pipeline_mode<synchronous>, transform_indices = @transform_1, window_bounds = array<i64: 64, 128>}, {pipeline_mode = #tpu.pipeline_mode<synchronous>, transform_indices = @transform_2, window_bounds = array<i64: 1, 128>}, {transform_indices = @transform_3, window_bounds = array<i64: 8, 128>}, {transform_indices = @transform_4, window_bounds = array<i64: 8, 128>}]} {
    %c0 = arith.constant 0 : index
    %c0_0 = arith.constant 0 : index
    %0 = vector.load %arg1[%c0, %c0_0] : memref<8x64xbf16, #tpu.memory_space<vmem>>, vector<8x64xbf16>
    %c0_1 = arith.constant 0 : index
    %c0_2 = arith.constant 0 : index
    %1 = vector.load %arg2[%c0_1, %c0_2] : memref<64x128xbf16, #tpu.memory_space<vmem>>, vector<64x128xbf16>
    %cst = arith.constant dense<0.000000e+00> : vector<8x128xf32>
    %2 = tpu.matmul %0, %1, %cst {dimension_numbers = #tpu.dot_dimension_numbers<[1], [0], [0], [1], [0, 0, 1, 1], [], []>} : vector<8x64xbf16>, vector<64x128xbf16>, vector<8x128xf32> -> vector<8x128xf32>
    %c0_3 = arith.constant 0 : index
    %c0_4 = arith.constant 0 : index
    %3 = vector.load %arg3[%c0_3, %c0_4] : memref<1x128xf32, #tpu.memory_space<vmem>>, vector<1x128xf32>
    %4 = vector.broadcast %3 : vector<1x128xf32> to vector<8x128xf32>
    %5 = arith.addf %2, %4 : vector<8x128xf32>
    %c0_5 = arith.constant 0 : index
    %c0_6 = arith.constant 0 : index
    %6 = vector.load %arg4[%c0_5, %c0_6] : memref<8x128xf32, #tpu.memory_space<vmem>>, vector<8x128xf32>
    %7 = arith.addf %5, %6 : vector<8x128xf32>
    %cst_7 = arith.constant 0.000000e+00 : f32
    %8 = vector.broadcast %cst_7 : f32 to vector<8x128xf32>
    %9 = arith.maximumf %7, %8 : vector<8x128xf32>
    %c0_8 = arith.constant 0 : index
    %c0_9 = arith.constant 0 : index
    %10 = vector.load %arg5[%c0_8, %c0_9] : memref<8x128xf32, #tpu.memory_space<vmem>>, vector<8x128xf32>
    tpu.vector_store %arg5[%c0_8, %c0_9], %9 {strides = array<i32>} : memref<8x128xf32, #tpu.memory_space<vmem>>, vector<8x128xf32>,
    return
  }
  func.func @transform_0(%arg0: i32) -> (i32, i32) {
    %c0_i32 = arith.constant 0 : i32
    %c0_i32_0 = arith.constant 0 : i32
    return %arg0, %c0_i32 : i32, i32
  }
  func.func @transform_1(%arg0: i32) -> (i32, i32) {
    %c0_i32 = arith.constant 0 : i32
    %c0_i32_0 = arith.constant 0 : i32
    %c0_i32_1 = arith.constant 0 : i32
    return %c0_i32, %c0_i32_0 : i32, i32
  }
  func.func @transform_2(%arg0: i32) -> (i32, i32) {
    %c0_i32 = arith.constant 0 : i32
    %c0_i32_0 = arith.constant 0 : i32
    %c0_i32_1 = arith.constant 0 : i32
    return %c0_i32, %c0_i32_0 : i32, i32
  }
  func.func @transform_3(%arg0: i32) -> (i32, i32) {
    %c0_i32 = arith.constant 0 : i32
    %c0_i32_0 = arith.constant 0 : i32
    return %arg0, %c0_i32 : i32, i32
  }
  func.func @transform_4(%arg0: i32) -> (i32, i32) {
    %c0_i32 = arith.constant 0 : i32
    %c0_i32_0 = arith.constant 0 : i32
    return %arg0, %c0_i32 : i32, i32
  }
}

module attributes {stable_mosaic.version = 11 : i64} {
  func.func @_fused_matmul_kernel(%arg0: i32, %arg1: memref<64x64xbf16, #tpu.memory_space<vmem>>, %arg2: memref<64x128xbf16, #tpu.memory_space<vmem>>, %arg3: memref<1x128xf32, #tpu.memory_space<vmem>>, %arg4: memref<64x128xf32, #tpu.memory_space<vmem>>) attributes {dimension_semantics = [#tpu.dimension_semantics<parallel>], iteration_bounds = array<i64: 2>, scalar_prefetch = 0 : i64, scratch_operands = 0 : i64, tpu.core_type = #tpu.core_type<tc>, window_params = [{transform_indices = @transform_0, window_bounds = array<i64: 64, 64>}, {pipeline_mode = #tpu.pipeline_mode<synchronous>, transform_indices = @transform_1, window_bounds = array<i64: 64, 128>}, {pipeline_mode = #tpu.pipeline_mode<synchronous>, transform_indices = @transform_2, window_bounds = array<i64: 1, 128>}, {transform_indices = @transform_3, window_bounds = array<i64: 64, 128>}]} {
    %c0 = arith.constant 0 : index
    %c0_0 = arith.constant 0 : index
    %0 = vector.load %arg1[%c0, %c0_0] : memref<64x64xbf16, #tpu.memory_space<vmem>>, vector<64x64xbf16>
    %c0_1 = arith.constant 0 : index
    %c0_2 = arith.constant 0 : index
    %1 = vector.load %arg2[%c0_1, %c0_2] : memref<64x128xbf16, #tpu.memory_space<vmem>>, vector<64x128xbf16>
    %cst = arith.constant dense<0.000000e+00> : vector<64x128xf32>
    %2 = tpu.matmul %0, %1, %cst {dimension_numbers = #tpu.dot_dimension_numbers<[1], [0], [0], [1], [0, 0, 1, 1], [], []>} : vector<64x64xbf16>, vector<64x128xbf16>, vector<64x128xf32> -> vector<64x128xf32>
    %c0_3 = arith.constant 0 : index
    %c0_4 = arith.constant 0 : index
    %3 = vector.load %arg3[%c0_3, %c0_4] : memref<1x128xf32, #tpu.memory_space<vmem>>, vector<1x128xf32>
    %4 = vector.broadcast %3 : vector<1x128xf32> to vector<64x128xf32>
    %5 = arith.addf %2, %4 : vector<64x128xf32>
    %c0_5 = arith.constant 0 : index
    %c0_6 = arith.constant 0 : index
    %6 = vector.load %arg4[%c0_5, %c0_6] : memref<64x128xf32, #tpu.memory_space<vmem>>, vector<64x128xf32>
    tpu.vector_store %arg4[%c0_5, %c0_6], %5 {strides = array<i32>} : memref<64x128xf32, #tpu.memory_space<vmem>>, vector<64x128xf32>,
    return
  }
  func.func @transform_0(%arg0: i32) -> (i32, i32) {
    %c0_i32 = arith.constant 0 : i32
    %c0_i32_0 = arith.constant 0 : i32
    return %arg0, %c0_i32 : i32, i32
  }
  func.func @transform_1(%arg0: i32) -> (i32, i32) {
    %c0_i32 = arith.constant 0 : i32
    %c0_i32_0 = arith.constant 0 : i32
    %c0_i32_1 = arith.constant 0 : i32
    return %c0_i32, %c0_i32_0 : i32, i32
  }
  func.func @transform_2(%arg0: i32) -> (i32, i32) {
    %c0_i32 = arith.constant 0 : i32
    %c0_i32_0 = arith.constant 0 : i32
    %c0_i32_1 = arith.constant 0 : i32
    return %c0_i32, %c0_i32_0 : i32, i32
  }
  func.func @transform_3(%arg0: i32) -> (i32, i32) {
    %c0_i32 = arith.constant 0 : i32
    %c0_i32_0 = arith.constant 0 : i32
    return %arg0, %c0_i32 : i32, i32
  }
}

</mosaic_0001>

<llo_original>
// kernel: _lambda_.6
$region0: #{_lambda_.6}
  #allocation0 [shape = 'u32[]', space=smem, size = 0x4, offset = 0x4, fixed_abs, tag = 'smem constant byte address 0x4 - core index']
  #allocation1 [shape = 'u32[72,128]{1,0:T(1,128)}', space=vmem, size = 0x9000, scoped, tag = 'internal scratch']
  %s0 = inlined_call_operand.vmem [shape: bf16[128,108], index: 0, kind: input, shape index: {}]
  %s1 = inlined_call_operand.vmem [shape: bf16[108,128], index: 1, kind: input, shape index: {}]
  %s2 = inlined_call_operand.vmem [shape: f32[1,128], index: 2, kind: input, shape index: {}]
  %s3 = inlined_call_operand.vmem [shape: f32[128,128], index: 3, kind: output, shape index: {}]
  %s4 = sld [smem:[#allocation0]]
  $region45: #{_lambda_.6} parent=0
    _
  %s6 = ssub.s32 1, %s4
  %s7 = scalar_select 0, %s6, %s4
  loop: start=0, step=1, limit=4
  $region2: #{_lambda_.6} parent=0 // loop_pre_header
    _
  $region3: #{_lambda_.6} parent=0 // loop_header
    %s9 = sphi 0, %s13
    %p10 = scmp.ge.s32.totalorder %s9, 4
    %s19 = sphi 0, %s21
    %s22 = sphi 0, %s19
    %s23 = sphi 0, %s22
    %s39 = sphi 0, %s23
    %s43 = sphi 0, %s43
    %s45 = sphi 0, %s43
    %s46 = sphi 0, %s45
    %s60 = sphi 0, %s46
    %s64 = sphi 0, %s64
    %s66 = sphi 0, %s64
    %s67 = sphi 0, %s66
    %s81 = sphi 0, %s67
    %s87 = sphi 0, %s89
    %s90 = sphi 0, %s87
    %s91 = sphi 0, %s90
    %s107 = sphi 0, %s91
  $region4: #{_lambda_.6} parent=0 // loop_header_branch
    %12 = sbr.rel (%p10) target = $region8
  $region5: #{_lambda_.6} parent=0 // loop_body
    %s14 = ssub.s32 %s9, 1
    %s15 = ssub.s32 %s9, 2
    %s16 = sadd.s32 %s9, 1
    %s17 = ssub.s32 %s9, %s16
    %p18 = scmp.eq.s32.totalorder %s17, 0
    %s20 = sadd.s32 %s19, 1
    %s21 = scalar_select %p18, %s19, %s20
    %p24 = pneg %p18
    %p25 = scmp.eq.s32.totalorder %s9, 1
    %p26 = por %p24, %p25
    %p27 = scmp.ne.s32.totalorder %s19, %s22
    %p28 = scmp.eq.s32.totalorder %s9, 0
    %p29 = por %p27, %p28
    %p30 = scmp.ne.s32.totalorder %s19, %s22
    %p31 = scmp.eq.s32.totalorder %s14, 1
    %p32 = por %p30, %p31
    %p33 = scmp.ne.s32.totalorder %s22, %s23
    %p34 = scmp.eq.s32.totalorder %s14, 0
    %p35 = por %p33, %p34
    %p36 = scmp.ne.s32.totalorder %s22, %s23
    %p37 = scmp.eq.s32.totalorder %s15, 1
    %p38 = por %p36, %p37
    %p40 = scmp.ne.s32.totalorder %s23, %s39
    %p41 = scmp.eq.s32.totalorder %s15, 0
    %p42 = por %p40, %p41
    %s44 = sadd.s32 %s43, 1
    %p47 = scmp.eq.s32.totalorder %s9, 1
    %p48 = scmp.ne.s32.totalorder %s43, %s45
    %p49 = scmp.eq.s32.totalorder %s9, 0
    %p50 = por %p48, %p49
    %p51 = scmp.ne.s32.totalorder %s43, %s45
    %p52 = scmp.eq.s32.totalorder %s14, 1
    %p53 = por %p51, %p52
    %p54 = scmp.ne.s32.totalorder %s45, %s46
    %p55 = scmp.eq.s32.totalorder %s14, 0
    %p56 = por %p54, %p55
    %p57 = scmp.ne.s32.totalorder %s45, %s46
    %p58 = scmp.eq.s32.totalorder %s15, 1
    %p59 = por %p57, %p58
    %p61 = scmp.ne.s32.totalorder %s46, %s60
    %p62 = scmp.eq.s32.totalorder %s15, 0
    %p63 = por %p61, %p62
    %s65 = sadd.s32 %s64, 1
    %p68 = scmp.eq.s32.totalorder %s9, 1
    %p69 = scmp.ne.s32.totalorder %s64, %s66
    %p70 = scmp.eq.s32.totalorder %s9, 0
    %p71 = por %p69, %p70
    %p72 = scmp.ne.s32.totalorder %s64, %s66
    %p73 = scmp.eq.s32.totalorder %s14, 1
    %p74 = por %p72, %p73
    %p75 = scmp.ne.s32.totalorder %s66, %s67
    %p76 = scmp.eq.s32.totalorder %s14, 0
    %p77 = por %p75, %p76
    %p78 = scmp.ne.s32.totalorder %s66, %s67
    %p79 = scmp.eq.s32.totalorder %s15, 1
    %p80 = por %p78, %p79
    %p82 = scmp.ne.s32.totalorder %s67, %s81
    %p83 = scmp.eq.s32.totalorder %s15, 0
    %p84 = por %p82, %p83
    %s85 = ssub.s32 %s9, %s16
    %p86 = scmp.eq.s32.totalorder %s85, 0
    %s88 = sadd.s32 %s87, 1
    %s89 = scalar_select %p86, %s87, %s88
    %p92 = pneg %p86
    %p93 = scmp.eq.s32.totalorder %s9, 1
    %p94 = por %p92, %p93
    %p95 = scmp.ne.s32.totalorder %s87, %s90
    %p96 = scmp.eq.s32.totalorder %s9, 0
    %p97 = por %p95, %p96
    %p98 = scmp.ne.s32.totalorder %s87, %s90
    %p99 = scmp.eq.s32.totalorder %s14, 1
    %p100 = por %p98, %p99
    %p101 = scmp.ne.s32.totalorder %s90, %s91
    %p102 = scmp.eq.s32.totalorder %s14, 0
    %p103 = por %p101, %p102
    %p104 = scmp.ne.s32.totalorder %s90, %s91
    %p105 = scmp.eq.s32.totalorder %s15, 1
    %p106 = por %p104, %p105
    %p108 = scmp.ne.s32.totalorder %s91, %s107
    %p109 = scmp.eq.s32.totalorder %s15, 0
    %p110 = por %p108, %p109
    %p111 = scmp.le.s32.totalorder 1, %s9
    %p112 = scmp.lt.s32.totalorder %s9, 3
    %p113 = pnand %p111, %p112
    %p114 = pneg %p113
    // Predicated region
    $region9: #{_lambda_.6} parent=5 // pred_check
      _
    $region10: #{_lambda_.6} parent=5 // pred_check_branch
      %116 = sbr.rel (%p113) target = $region12
    $region11: #{_lambda_.6} parent=5 // pred_region
      %s117 = ssub.s32 %s9, 1
      // Predicated region
      $region13: #{_lambda_.6} parent=11 // pred_check
        %p118 = pneg %p56
      $region14: #{_lambda_.6} parent=11 // pred_check_branch
        %120 = sbr.rel (%p118) target = $region16
      $region15: #{_lambda_.6} parent=11 // pred_region
        _
      $region16: #{_lambda_.6} parent=11 // pred_fallthru
        _
      // Predicated region
      $region17: #{_lambda_.6} parent=11 // pred_check
        %p121 = pneg %p77
      $region18: #{_lambda_.6} parent=11 // pred_check_branch
        %123 = sbr.rel (%p121) target = $region20
      $region19: #{_lambda_.6} parent=11 // pred_region
        _
      $region20: #{_lambda_.6} parent=11 // pred_fallthru
        _
    $region12: #{_lambda_.6} parent=5 // pred_fallthru
      _
    %p124 = scmp.lt.s32.totalorder %s9, 2
    // Predicated region
    $region21: #{_lambda_.6} parent=5 // pred_check
      %p125 = pneg %p124
    $region22: #{_lambda_.6} parent=5 // pred_check_branch
      %127 = sbr.rel (%p125) target = $region24
    $region23: #{_lambda_.6} parent=5 // pred_region
      // Predicated region
      $region25: #{_lambda_.6} parent=23 // pred_check
        %p128 = pneg %p29
      $region26: #{_lambda_.6} parent=23 // pred_check_branch
        %130 = sbr.rel (%p128) target = $region28
      $region27: #{_lambda_.6} parent=23 // pred_region
        %s131 = smul.u32 8, %s9
        %p132 = scmp.lt.s32.totalorder %s131, 15
        %s133 = scalar_select %p132, %s131, 15
        %s134 = smul.addr %s133, 4
        %s135 = scalar_lea.vmem %s0, %s134
        %s136 = smul.u32 8, %s9
      $region28: #{_lambda_.6} parent=23 // pred_fallthru
        _
    $region24: #{_lambda_.6} parent=5 // pred_fallthru
      _
    %p137 = scmp.le.s32.totalorder 1, %s9
    %p138 = scmp.lt.s32.totalorder %s9, 3
    %p139 = pnand %p137, %p138
    %p140 = pneg %p139
    // Predicated region
    $region29: #{_lambda_.6} parent=5 // pred_check
      _
    $region30: #{_lambda_.6} parent=5 // pred_check_branch
      %142 = sbr.rel (%p139) target = $region32
    $region31: #{_lambda_.6} parent=5 // pred_region
      %s143 = ssub.s32 %s9, 1
      %s144 = smul.u32 8, %s14
      %p145 = scmp.lt.s32.totalorder %s144, 15
      %s146 = scalar_select %p145, %s144, 15
      %s147 = smul.addr %s146, 4
      %s148 = scalar_lea.vmem %s0, %s147
      %p149 = pneg %p35
      %p150 = pneg %p32
      %p151 = pneg %p56
      %p152 = pneg %p53
      %p153 = pneg %p77
      %p154 = pneg %p74
      %p155 = pneg %p103
      %p156 = pneg %p100
      %s157 = smul.u32 8, %s14
      %p158 = scmp.lt.s32.totalorder %s157, 15
      %s159 = scalar_select %p158, %s157, 15
      %s160 = smul.addr %s159, 8
      %s161 = scalar_lea.vmem %s3, %s160
      %s162 = smul.u32 8, %s14
      %p163 = scmp.lt.s32.totalorder %s162, 15
      %s164 = scalar_select %p163, %s162, 15
      %s165 = smul.addr %s164, 4
      %s166 = scalar_lea.vmem %s0, %s165
      %s167 = smul.u32 8, %s14
      %s168 = smul.u32 8, %s14
      %p169 = scmp.lt.s32.totalorder %s168, 15
      %s170 = scalar_select %p169, %s168, 15
      %s171 = smul.addr %s170, 8
      %s172 = scalar_lea.vmem %s3, %s171
      %s173 = smul.u32 8, %s14
      %v175 = vld [vmem:[%s166] sm:$0xf]
      %v176 = vld [vmem:[%s166 + $0x4] sm:$0xf]
      %v177 = vld [vmem:[%s166 + $0x8] sm:$0xf]
      %v178 = vld [vmem:[%s166 + $0xc] sm:$0xf]
      %v179 = vld [vmem:[%s166 + $0x10] sm:$0xf]
      %v180 = vld [vmem:[%s166 + $0x14] sm:$0xf]
      %v181 = vld [vmem:[%s166 + $0x18] sm:$0xf]
      %v182 = vld [vmem:[%s166 + $0x1c] sm:$0xf]
      %v183 = vld [vmem:[%s1] sm:$0xf]
      %v184 = vld [vmem:[%s1 + $0x4] sm:$0xf]
      %v185 = vld [vmem:[%s1 + $0x8] sm:$0xf]
      %v186 = vld [vmem:[%s1 + $0xc] sm:$0xf]
      %v187 = vld [vmem:[%s1 + $0x10] sm:$0xf]
      %v188 = vld [vmem:[%s1 + $0x14] sm:$0xf]
      %v189 = vld [vmem:[%s1 + $0x18] sm:$0xf]
      %v190 = vld [vmem:[%s1 + $0x1c] sm:$0xf]
      %v191 = vld [vmem:[%s1 + $0x20] sm:$0xf]
      %v192 = vld [vmem:[%s1 + $0x24] sm:$0xf]
      %v193 = vld [vmem:[%s1 + $0x28] sm:$0xf]
      %v194 = vld [vmem:[%s1 + $0x2c] sm:$0xf]
      %v195 = vld [vmem:[%s1 + $0x30] sm:$0xf]
      %v196 = vld [vmem:[%s1 + $0x34] sm:$0x3]
      %v197 = vld [vmem:[%s2] sm:$0x1]
      %v199 = vperm.slane %v197, 0
      %v209 = vunpack.c.l.b16 %v175
      %v210 = vunpack.c.l.b16 %v176
      %v211 = vunpack.c.l.b16 %v177
      %v212 = vunpack.c.l.b16 %v178
      %v213 = vunpack.c.l.b16 %v179
      %v214 = vunpack.c.l.b16 %v180
      %v215 = vunpack.c.l.b16 %v181
      %v216 = vunpack.c.l.b16 %v182
      %v217 = vpack.c.b16 %v210, %v209
      %v218 = vpack.c.b16 %v212, %v211
      %v219 = vpack.c.b16 %v214, %v213
      %v220 = vpack.c.b16 %v216, %v215
      %v235 = vunpack.c.l.b16 %v183
      %v236 = vunpack.c.l.b16 %v184
      %v237 = vunpack.c.l.b16 %v185
      %v238 = vunpack.c.l.b16 %v186
      %v239 = vunpack.c.l.b16 %v187
      %v240 = vunpack.c.l.b16 %v188
      %v241 = vunpack.c.l.b16 %v189
      %v242 = vunpack.c.l.b16 %v190
      %v243 = vunpack.c.l.b16 %v191
      %v244 = vunpack.c.l.b16 %v192
      %v245 = vunpack.c.l.b16 %v193
      %v246 = vunpack.c.l.b16 %v194
      %v247 = vunpack.c.l.b16 %v195
      %v248 = vunpack.c.l.b16 %v196
      %v249 = vpack.c.b16 %v236, %v235
      %v250 = vpack.c.b16 %v238, %v237
      %v251 = vpack.c.b16 %v240, %v239
      %v252 = vpack.c.b16 %v242, %v241
      %v253 = vpack.c.b16 %v244, %v243
      %v254 = vpack.c.b16 %v246, %v245
      %v255 = vpack.c.b16 %v248, %v247
      %vm262 = vcmask 883712
      %v264 = vsel %vm262, %v217, 0
      %v267 = vsel %vm262, %v218, 0
      %v270 = vsel %vm262, %v219, 0
      %v273 = vsel %vm262, %v220, 0
      %vm275 = vcmask 1045504
      %v277 = vsel %vm275, %v255, 0
      %279 = vmatpush.bf16.msra.mxu0 0
      %280 = vmatpush.bf16.msra.mxu0 %v277
      %281 = vmatpush.bf16.msra.mxu0 %v254
      %282 = vmatpush.bf16.msra.mxu0 %v253
      %283 = vmatpush.bf16.msra.mxu0 %v252
      %284 = vmatpush.bf16.msra.mxu0 %v251
      %285 = vmatpush.bf16.msra.mxu0 %v250
      %286 = vmatpush.bf16.msra.mxu0 %v249
      %287 = vmatmul.bf16.gmra.mxu0 %v264
      %v288 = vpop.f32.mrf.mxu0
      %v289 = vadd.f32 %v199, %v288
      %v290 = vpop.f32.mrf.mxu0
      %v291 = vadd.f32 %v199, %v290
      %292 = vmatmul.bf16.gmra.mxu0 %v267
      %v293 = vpop.f32.mrf.mxu0
      %v294 = vadd.f32 %v199, %v293
      %v295 = vpop.f32.mrf.mxu0
      %v296 = vadd.f32 %v199, %v295
      %297 = vmatmul.bf16.gmra.mxu0 %v270
      %v298 = vpop.f32.mrf.mxu0
      %v299 = vadd.f32 %v199, %v298
      %v300 = vpop.f32.mrf.mxu0
      %v301 = vadd.f32 %v199, %v300
      %302 = vmatmul.bf16.gmra.mxu0 %v273
      %v303 = vpop.f32.mrf.mxu0
      %v304 = vadd.f32 %v199, %v303
      %v305 = vpop.f32.mrf.mxu0
      %v306 = vadd.f32 %v199, %v305
      %307 = vdwg.mxu0
      %v308 = vmax.f32 %v289, 0.0
      %v309 = vmax.f32 %v291, 0.0
      %v310 = vmax.f32 %v294, 0.0
      %v311 = vmax.f32 %v296, 0.0
      %v312 = vmax.f32 %v299, 0.0
      %v313 = vmax.f32 %v301, 0.0
      %v314 = vmax.f32 %v304, 0.0
      %v315 = vmax.f32 %v306, 0.0
      %316 = vst [vmem:[%s172] sm:$0xff] %v308
      %317 = vst [vmem:[%s172 + $0x8] sm:$0xff] %v309
      %318 = vst [vmem:[%s172 + $0x10] sm:$0xff] %v310
      %319 = vst [vmem:[%s172 + $0x18] sm:$0xff] %v311
      %320 = vst [vmem:[%s172 + $0x20] sm:$0xff] %v312
      %321 = vst [vmem:[%s172 + $0x28] sm:$0xff] %v313
      %322 = vst [vmem:[%s172 + $0x30] sm:$0xff] %v314
      %323 = vst [vmem:[%s172 + $0x38] sm:$0xff] %v315
      %s324 = smul.u32 8, %s14
      %p325 = scmp.lt.s32.totalorder %s324, 15
      %s326 = scalar_select %p325, %s324, 15
      %s327 = smul.addr %s326, 8
      %s328 = scalar_lea.vmem %s3, %s327
      // Predicated region
      $region33: #{_lambda_.6} parent=31 // pred_check
        %p329 = pneg %p100
      $region34: #{_lambda_.6} parent=31 // pred_check_branch
        %331 = sbr.rel (%p329) target = $region36
      $region35: #{_lambda_.6} parent=31 // pred_region
        %s332 = smul.u32 8, %s14
      $region36: #{_lambda_.6} parent=31 // pred_fallthru
        _
    $region32: #{_lambda_.6} parent=5 // pred_fallthru
      _
    %p333 = scmp.le.s32.totalorder 2, %s9
    // Predicated region
    $region37: #{_lambda_.6} parent=5 // pred_check
      %p334 = pneg %p333
    $region38: #{_lambda_.6} parent=5 // pred_check_branch
      %336 = sbr.rel (%p334) target = $region40
    $region39: #{_lambda_.6} parent=5 // pred_region
      %s337 = ssub.s32 %s9, 2
      // Predicated region
      $region41: #{_lambda_.6} parent=39 // pred_check
        %p338 = pneg %p106
      $region42: #{_lambda_.6} parent=39 // pred_check_branch
        %340 = sbr.rel (%p338) target = $region44
      $region43: #{_lambda_.6} parent=39 // pred_region
        %s341 = smul.u32 8, %s15
        %p342 = scmp.lt.s32.totalorder %s341, 15
        %s343 = scalar_select %p342, %s341, 15
        %s344 = smul.addr %s343, 8
        %s345 = scalar_lea.vmem %s3, %s344
      $region44: #{_lambda_.6} parent=39 // pred_fallthru
        _
    $region40: #{_lambda_.6} parent=5 // pred_fallthru
      _
  $region6: #{_lambda_.6} parent=0 // loop_footer
    %s13 = sadd.s32 1, %s9
  $region7: #{_lambda_.6} parent=0 // loop_footer_branch
    %8 = sbr.rel target = $region3
  $region8: #{_lambda_.6} parent=0 // loop_exit
    _

// kernel: _lambda_.7
$region0: #{_lambda_.7}
  #allocation0 [shape = 'u32[]', space=smem, size = 0x4, offset = 0x4, fixed_abs, tag = 'smem constant byte address 0x4 - core index']
  #allocation1 [shape = 'u32[72,128]{1,0:T(1,128)}', space=vmem, size = 0x9000, scoped, tag = 'internal scratch']
  %s0 = inlined_call_operand.vmem [shape: bf16[128,216], index: 0, kind: input, shape index: {}]
  %s1 = inlined_call_operand.vmem [shape: bf16[216,128], index: 1, kind: input, shape index: {}]
  %s2 = inlined_call_operand.vmem [shape: f32[1,128], index: 2, kind: input, shape index: {}]
  %s3 = inlined_call_operand.vmem [shape: f32[128,128], index: 3, kind: output, shape index: {}]
  %s4 = sld [smem:[#allocation0]]
  $region45: #{_lambda_.7} parent=0
    _
  %s6 = ssub.s32 1, %s4
  %s7 = scalar_select 0, %s6, %s4
  loop: start=0, step=1, limit=4
  $region2: #{_lambda_.7} parent=0 // loop_pre_header
    _
  $region3: #{_lambda_.7} parent=0 // loop_header
    %s9 = sphi 0, %s13
    %p10 = scmp.ge.s32.totalorder %s9, 4
    %s19 = sphi 0, %s21
    %s22 = sphi 0, %s19
    %s23 = sphi 0, %s22
    %s39 = sphi 0, %s23
    %s43 = sphi 0, %s43
    %s45 = sphi 0, %s43
    %s46 = sphi 0, %s45
    %s60 = sphi 0, %s46
    %s64 = sphi 0, %s64
    %s66 = sphi 0, %s64
    %s67 = sphi 0, %s66
    %s81 = sphi 0, %s67
    %s87 = sphi 0, %s89
    %s90 = sphi 0, %s87
    %s91 = sphi 0, %s90
    %s107 = sphi 0, %s91
  $region4: #{_lambda_.7} parent=0 // loop_header_branch
    %12 = sbr.rel (%p10) target = $region8
  $region5: #{_lambda_.7} parent=0 // loop_body
    %s14 = ssub.s32 %s9, 1
    %s15 = ssub.s32 %s9, 2
    %s16 = sadd.s32 %s9, 1
    %s17 = ssub.s32 %s9, %s16
    %p18 = scmp.eq.s32.totalorder %s17, 0
    %s20 = sadd.s32 %s19, 1
    %s21 = scalar_select %p18, %s19, %s20
    %p24 = pneg %p18
    %p25 = scmp.eq.s32.totalorder %s9, 1
    %p26 = por %p24, %p25
    %p27 = scmp.ne.s32.totalorder %s19, %s22
    %p28 = scmp.eq.s32.totalorder %s9, 0
    %p29 = por %p27, %p28
    %p30 = scmp.ne.s32.totalorder %s19, %s22
    %p31 = scmp.eq.s32.totalorder %s14, 1
    %p32 = por %p30, %p31
    %p33 = scmp.ne.s32.totalorder %s22, %s23
    %p34 = scmp.eq.s32.totalorder %s14, 0
    %p35 = por %p33, %p34
    %p36 = scmp.ne.s32.totalorder %s22, %s23
    %p37 = scmp.eq.s32.totalorder %s15, 1
    %p38 = por %p36, %p37
    %p40 = scmp.ne.s32.totalorder %s23, %s39
    %p41 = scmp.eq.s32.totalorder %s15, 0
    %p42 = por %p40, %p41
    %s44 = sadd.s32 %s43, 1
    %p47 = scmp.eq.s32.totalorder %s9, 1
    %p48 = scmp.ne.s32.totalorder %s43, %s45
    %p49 = scmp.eq.s32.totalorder %s9, 0
    %p50 = por %p48, %p49
    %p51 = scmp.ne.s32.totalorder %s43, %s45
    %p52 = scmp.eq.s32.totalorder %s14, 1
    %p53 = por %p51, %p52
    %p54 = scmp.ne.s32.totalorder %s45, %s46
    %p55 = scmp.eq.s32.totalorder %s14, 0
    %p56 = por %p54, %p55
    %p57 = scmp.ne.s32.totalorder %s45, %s46
    %p58 = scmp.eq.s32.totalorder %s15, 1
    %p59 = por %p57, %p58
    %p61 = scmp.ne.s32.totalorder %s46, %s60
    %p62 = scmp.eq.s32.totalorder %s15, 0
    %p63 = por %p61, %p62
    %s65 = sadd.s32 %s64, 1
    %p68 = scmp.eq.s32.totalorder %s9, 1
    %p69 = scmp.ne.s32.totalorder %s64, %s66
    %p70 = scmp.eq.s32.totalorder %s9, 0
    %p71 = por %p69, %p70
    %p72 = scmp.ne.s32.totalorder %s64, %s66
    %p73 = scmp.eq.s32.totalorder %s14, 1
    %p74 = por %p72, %p73
    %p75 = scmp.ne.s32.totalorder %s66, %s67
    %p76 = scmp.eq.s32.totalorder %s14, 0
    %p77 = por %p75, %p76
    %p78 = scmp.ne.s32.totalorder %s66, %s67
    %p79 = scmp.eq.s32.totalorder %s15, 1
    %p80 = por %p78, %p79
    %p82 = scmp.ne.s32.totalorder %s67, %s81
    %p83 = scmp.eq.s32.totalorder %s15, 0
    %p84 = por %p82, %p83
    %s85 = ssub.s32 %s9, %s16
    %p86 = scmp.eq.s32.totalorder %s85, 0
    %s88 = sadd.s32 %s87, 1
    %s89 = scalar_select %p86, %s87, %s88
    %p92 = pneg %p86
    %p93 = scmp.eq.s32.totalorder %s9, 1
    %p94 = por %p92, %p93
    %p95 = scmp.ne.s32.totalorder %s87, %s90
    %p96 = scmp.eq.s32.totalorder %s9, 0
    %p97 = por %p95, %p96
    %p98 = scmp.ne.s32.totalorder %s87, %s90
    %p99 = scmp.eq.s32.totalorder %s14, 1
    %p100 = por %p98, %p99
    %p101 = scmp.ne.s32.totalorder %s90, %s91
    %p102 = scmp.eq.s32.totalorder %s14, 0
    %p103 = por %p101, %p102
    %p104 = scmp.ne.s32.totalorder %s90, %s91
    %p105 = scmp.eq.s32.totalorder %s15, 1
    %p106 = por %p104, %p105
    %p108 = scmp.ne.s32.totalorder %s91, %s107
    %p109 = scmp.eq.s32.totalorder %s15, 0
    %p110 = por %p108, %p109
    %p111 = scmp.le.s32.totalorder 1, %s9
    %p112 = scmp.lt.s32.totalorder %s9, 3
    %p113 = pnand %p111, %p112
    %p114 = pneg %p113
    // Predicated region
    $region9: #{_lambda_.7} parent=5 // pred_check
      _
    $region10: #{_lambda_.7} parent=5 // pred_check_branch
      %116 = sbr.rel (%p113) target = $region12
    $region11: #{_lambda_.7} parent=5 // pred_region
      %s117 = ssub.s32 %s9, 1
      // Predicated region
      $region13: #{_lambda_.7} parent=11 // pred_check
        %p118 = pneg %p56
      $region14: #{_lambda_.7} parent=11 // pred_check_branch
        %120 = sbr.rel (%p118) target = $region16
      $region15: #{_lambda_.7} parent=11 // pred_region
        _
      $region16: #{_lambda_.7} parent=11 // pred_fallthru
        _
      // Predicated region
      $region17: #{_lambda_.7} parent=11 // pred_check
        %p121 = pneg %p77
      $region18: #{_lambda_.7} parent=11 // pred_check_branch
        %123 = sbr.rel (%p121) target = $region20
      $region19: #{_lambda_.7} parent=11 // pred_region
        _
      $region20: #{_lambda_.7} parent=11 // pred_fallthru
        _
    $region12: #{_lambda_.7} parent=5 // pred_fallthru
      _
    %p124 = scmp.lt.s32.totalorder %s9, 2
    // Predicated region
    $region21: #{_lambda_.7} parent=5 // pred_check
      %p125 = pneg %p124
    $region22: #{_lambda_.7} parent=5 // pred_check_branch
      %127 = sbr.rel (%p125) target = $region24
    $region23: #{_lambda_.7} parent=5 // pred_region
      // Predicated region
      $region25: #{_lambda_.7} parent=23 // pred_check
        %p128 = pneg %p29
      $region26: #{_lambda_.7} parent=23 // pred_check_branch
        %130 = sbr.rel (%p128) target = $region28
      $region27: #{_lambda_.7} parent=23 // pred_region
        %s131 = smul.u32 8, %s9
        %p132 = scmp.lt.s32.totalorder %s131, 15
        %s133 = scalar_select %p132, %s131, 15
        %s134 = smul.addr %s133, 2
        %s135 = smul.addr %s134, 4
        %s136 = scalar_lea.vmem %s0, %s135
        %s137 = smul.u32 8, %s9
      $region28: #{_lambda_.7} parent=23 // pred_fallthru
        _
    $region24: #{_lambda_.7} parent=5 // pred_fallthru
      _
    %p138 = scmp.le.s32.totalorder 1, %s9
    %p139 = scmp.lt.s32.totalorder %s9, 3
    %p140 = pnand %p138, %p139
    %p141 = pneg %p140
    // Predicated region
    $region29: #{_lambda_.7} parent=5 // pred_check
      _
    $region30: #{_lambda_.7} parent=5 // pred_check_branch
      %143 = sbr.rel (%p140) target = $region32
    $region31: #{_lambda_.7} parent=5 // pred_region
      %s144 = ssub.s32 %s9, 1
      %s145 = smul.u32 8, %s14
      %p146 = scmp.lt.s32.totalorder %s145, 15
      %s147 = scalar_select %p146, %s145, 15
      %s148 = smul.addr %s147, 2
      %s149 = smul.addr %s148, 4
      %s150 = scalar_lea.vmem %s0, %s149
      %p151 = pneg %p35
      %p152 = pneg %p32
      %p153 = pneg %p56
      %p154 = pneg %p53
      %p155 = pneg %p77
      %p156 = pneg %p74
      %p157 = pneg %p103
      %p158 = pneg %p100
      %s159 = smul.u32 8, %s14
      %p160 = scmp.lt.s32.totalorder %s159, 15
      %s161 = scalar_select %p160, %s159, 15
      %s162 = smul.addr %s161, 8
      %s163 = scalar_lea.vmem %s3, %s162
      %s164 = smul.u32 8, %s14
      %p165 = scmp.lt.s32.totalorder %s164, 15
      %s166 = scalar_select %p165, %s164, 15
      %s167 = smul.addr %s166, 2
      %s168 = smul.addr %s167, 4
      %s169 = scalar_lea.vmem %s0, %s168
      %s170 = smul.u32 8, %s14
      %s171 = smul.u32 8, %s14
      %p172 = scmp.lt.s32.totalorder %s171, 15
      %s173 = scalar_select %p172, %s171, 15
      %s174 = smul.addr %s173, 8
      %s175 = scalar_lea.vmem %s3, %s174
      %s176 = smul.u32 8, %s14
      %v178 = vld [vmem:[%s169] sm:$0xff]
      %v179 = vld [vmem:[%s169 + $0x8] sm:$0xff]
      %v180 = vld [vmem:[%s169 + $0x10] sm:$0xff]
      %v181 = vld [vmem:[%s169 + $0x18] sm:$0xff]
      %v182 = vld [vmem:[%s169 + $0x20] sm:$0xff]
      %v183 = vld [vmem:[%s169 + $0x28] sm:$0xff]
      %v184 = vld [vmem:[%s169 + $0x30] sm:$0xff]
      %v185 = vld [vmem:[%s169 + $0x38] sm:$0xff]
      %v186 = vld [vmem:[%s1] sm:$0xf]
      %v187 = vld [vmem:[%s1 + $0x4] sm:$0xf]
      %v188 = vld [vmem:[%s1 + $0x8] sm:$0xf]
      %v189 = vld [vmem:[%s1 + $0xc] sm:$0xf]
      %v190 = vld [vmem:[%s1 + $0x10] sm:$0xf]
      %v191 = vld [vmem:[%s1 + $0x14] sm:$0xf]
      %v192 = vld [vmem:[%s1 + $0x18] sm:$0xf]
      %v193 = vld [vmem:[%s1 + $0x1c] sm:$0xf]
      %v194 = vld [vmem:[%s1 + $0x20] sm:$0xf]
      %v195 = vld [vmem:[%s1 + $0x24] sm:$0xf]
      %v196 = vld [vmem:[%s1 + $0x28] sm:$0xf]
      %v197 = vld [vmem:[%s1 + $0x2c] sm:$0xf]
      %v198 = vld [vmem:[%s1 + $0x30] sm:$0xf]
      %v199 = vld [vmem:[%s1 + $0x34] sm:$0xf]
      %v200 = vld [vmem:[%s1 + $0x38] sm:$0xf]
      %v201 = vld [vmem:[%s1 + $0x3c] sm:$0xf]
      %v202 = vld [vmem:[%s1 + $0x40] sm:$0xf]
      %v203 = vld [vmem:[%s1 + $0x44] sm:$0xf]
      %v204 = vld [vmem:[%s1 + $0x48] sm:$0xf]
      %v205 = vld [vmem:[%s1 + $0x4c] sm:$0xf]
      %v206 = vld [vmem:[%s1 + $0x50] sm:$0xf]
      %v207 = vld [vmem:[%s1 + $0x54] sm:$0xf]
      %v208 = vld [vmem:[%s1 + $0x58] sm:$0xf]
      %v209 = vld [vmem:[%s1 + $0x5c] sm:$0xf]
      %v210 = vld [vmem:[%s1 + $0x60] sm:$0xf]
      %v211 = vld [vmem:[%s1 + $0x64] sm:$0xf]
      %v212 = vld [vmem:[%s1 + $0x68] sm:$0xf]
      %v213 = vld [vmem:[%s2] sm:$0x1]
      %v215 = vperm.slane %v213, 0
      %v225 = vunpack.c.l.b16 %v178
      %v226 = vunpack.c.h.b16 %v178
      %v227 = vunpack.c.l.b16 %v179
      %v228 = vunpack.c.h.b16 %v179
      %v229 = vunpack.c.l.b16 %v180
      %v230 = vunpack.c.h.b16 %v180
      %v231 = vunpack.c.l.b16 %v181
      %v232 = vunpack.c.h.b16 %v181
      %v233 = vunpack.c.l.b16 %v182
      %v234 = vunpack.c.h.b16 %v182
      %v235 = vunpack.c.l.b16 %v183
      %v236 = vunpack.c.h.b16 %v183
      %v237 = vunpack.c.l.b16 %v184
      %v238 = vunpack.c.h.b16 %v184
      %v239 = vunpack.c.l.b16 %v185
      %v240 = vunpack.c.h.b16 %v185
      %v241 = vpack.c.b16 %v227, %v225
      %v242 = vpack.c.b16 %v228, %v226
      %v243 = vpack.c.b16 %v231, %v229
      %v244 = vpack.c.b16 %v232, %v230
      %v245 = vpack.c.b16 %v235, %v233
      %v246 = vpack.c.b16 %v236, %v234
      %v247 = vpack.c.b16 %v239, %v237
      %v248 = vpack.c.b16 %v240, %v238
      %v280 = vunpack.c.l.b16 %v186
      %v281 = vunpack.c.l.b16 %v187
      %v282 = vunpack.c.l.b16 %v188
      %v283 = vunpack.c.l.b16 %v189
      %v284 = vunpack.c.l.b16 %v190
      %v285 = vunpack.c.l.b16 %v191
      %v286 = vunpack.c.l.b16 %v192
      %v287 = vunpack.c.l.b16 %v193
      %v288 = vunpack.c.l.b16 %v194
      %v289 = vunpack.c.l.b16 %v195
      %v290 = vunpack.c.l.b16 %v196
      %v291 = vunpack.c.l.b16 %v197
      %v292 = vunpack.c.l.b16 %v198
      %v293 = vunpack.c.l.b16 %v199
      %v294 = vunpack.c.l.b16 %v200
      %v295 = vunpack.c.l.b16 %v201
      %v296 = vunpack.c.l.b16 %v202
      %v297 = vunpack.c.l.b16 %v203
      %v298 = vunpack.c.l.b16 %v204
      %v299 = vunpack.c.l.b16 %v205
      %v300 = vunpack.c.l.b16 %v206
      %v301 = vunpack.c.l.b16 %v207
      %v302 = vunpack.c.l.b16 %v208
      %v303 = vunpack.c.l.b16 %v209
      %v304 = vunpack.c.l.b16 %v210
      %v305 = vunpack.c.l.b16 %v211
      %v306 = vunpack.c.l.b16 %v212
      %v307 = vpack.c.b16 %v281, %v280
      %v308 = vpack.c.b16 %v283, %v282
      %v309 = vpack.c.b16 %v285, %v284
      %v310 = vpack.c.b16 %v287, %v286
      %v311 = vpack.c.b16 %v289, %v288
      %v312 = vpack.c.b16 %v291, %v290
      %v313 = vpack.c.b16 %v293, %v292
      %v314 = vpack.c.b16 %v295, %v294
      %v315 = vpack.c.b16 %v297, %v296
      %v316 = vpack.c.b16 %v299, %v298
      %v317 = vpack.c.b16 %v301, %v300
      %v318 = vpack.c.b16 %v303, %v302
      %v319 = vpack.c.b16 %v305, %v304
      %v320 = vpack.c.b16 %v306, %v306
      %vm334 = vcmask 719872
      %v336 = vsel %vm334, %v242, 0
      %v339 = vsel %vm334, %v244, 0
      %v342 = vsel %vm334, %v246, 0
      %v345 = vsel %vm334, %v248, 0
      %vm347 = vcmask 1043456
      %v349 = vsel %vm347, %v320, 0
      %351 = vmatpush.bf16.msra.mxu0 %v314
      %352 = vmatpush.bf16.msra.mxu0 %v313
      %353 = vmatpush.bf16.msra.mxu0 %v312
      %354 = vmatpush.bf16.msra.mxu0 %v311
      %355 = vmatpush.bf16.msra.mxu0 %v310
      %356 = vmatpush.bf16.msra.mxu0 %v309
      %357 = vmatpush.bf16.msra.mxu0 %v308
      %358 = vmatpush.bf16.msra.mxu0 %v307
      %359 = vmatmul.bf16.gmra.mxu0 %v241
      %v360 = vpop.f32.mrf.mxu0
      %v361 = vadd.f32 %v215, %v360
      %v362 = vpop.f32.mrf.mxu0
      %v363 = vadd.f32 %v215, %v362
      %364 = vmatmul.bf16.gmra.mxu0 %v243
      %v365 = vpop.f32.mrf.mxu0
      %v366 = vadd.f32 %v215, %v365
      %v367 = vpop.f32.mrf.mxu0
      %v368 = vadd.f32 %v215, %v367
      %369 = vmatmul.bf16.gmra.mxu0 %v245
      %v370 = vpop.f32.mrf.mxu0
      %v371 = vadd.f32 %v215, %v370
      %v372 = vpop.f32.mrf.mxu0
      %v373 = vadd.f32 %v215, %v372
      %374 = vmatmul.bf16.gmra.mxu0 %v247
      %v375 = vpop.f32.mrf.mxu0
      %v376 = vadd.f32 %v215, %v375
      %v377 = vpop.f32.mrf.mxu0
      %v378 = vadd.f32 %v215, %v377
      %379 = vdwg.mxu0
      %380 = vmatpush.bf16.msra.mxu0 0
      %381 = vmatpush.bf16.msra.mxu0 0
      %382 = vmatpush.bf16.msra.mxu0 %v349
      %383 = vmatpush.bf16.msra.mxu0 %v319
      %384 = vmatpush.bf16.msra.mxu0 %v318
      %385 = vmatpush.bf16.msra.mxu0 %v317
      %386 = vmatpush.bf16.msra.mxu0 %v316
      %387 = vmatpush.bf16.msra.mxu0 %v315
      %388 = vmatmul.bf16.gmra.mxu0 %v336
      %v389 = vpop.f32.mrf.mxu0
      %v390 = vadd.f32 %v361, %v389
      %v391 = vpop.f32.mrf.mxu0
      %v392 = vadd.f32 %v363, %v391
      %393 = vmatmul.bf16.gmra.mxu0 %v339
      %v394 = vpop.f32.mrf.mxu0
      %v395 = vadd.f32 %v366, %v394
      %v396 = vpop.f32.mrf.mxu0
      %v397 = vadd.f32 %v368, %v396
      %398 = vmatmul.bf16.gmra.mxu0 %v342
      %v399 = vpop.f32.mrf.mxu0
      %v400 = vadd.f32 %v371, %v399
      %v401 = vpop.f32.mrf.mxu0
      %v402 = vadd.f32 %v373, %v401
      %403 = vmatmul.bf16.gmra.mxu0 %v345
      %v404 = vpop.f32.mrf.mxu0
      %v405 = vadd.f32 %v376, %v404
      %v406 = vpop.f32.mrf.mxu0
      %v407 = vadd.f32 %v378, %v406
      %408 = vdwg.mxu0
      %v409 = vmax.f32 %v390, 0.0
      %v410 = vmax.f32 %v392, 0.0
      %v411 = vmax.f32 %v395, 0.0
      %v412 = vmax.f32 %v397, 0.0
      %v413 = vmax.f32 %v400, 0.0
      %v414 = vmax.f32 %v402, 0.0
      %v415 = vmax.f32 %v405, 0.0
      %v416 = vmax.f32 %v407, 0.0
      %417 = vst [vmem:[%s175] sm:$0xff] %v409
      %418 = vst [vmem:[%s175 + $0x8] sm:$0xff] %v410
      %419 = vst [vmem:[%s175 + $0x10] sm:$0xff] %v411
      %420 = vst [vmem:[%s175 + $0x18] sm:$0xff] %v412
      %421 = vst [vmem:[%s175 + $0x20] sm:$0xff] %v413
      %422 = vst [vmem:[%s175 + $0x28] sm:$0xff] %v414
      %423 = vst [vmem:[%s175 + $0x30] sm:$0xff] %v415
      %424 = vst [vmem:[%s175 + $0x38] sm:$0xff] %v416
      %s425 = smul.u32 8, %s14
      %p426 = scmp.lt.s32.totalorder %s425, 15
      %s427 = scalar_select %p426, %s425, 15
      %s428 = smul.addr %s427, 8
      %s429 = scalar_lea.vmem %s3, %s428
      // Predicated region
      $region33: #{_lambda_.7} parent=31 // pred_check
        %p430 = pneg %p100
      $region34: #{_lambda_.7} parent=31 // pred_check_branch
        %432 = sbr.rel (%p430) target = $region36
      $region35: #{_lambda_.7} parent=31 // pred_region
        %s433 = smul.u32 8, %s14
      $region36: #{_lambda_.7} parent=31 // pred_fallthru
        _
    $region32: #{_lambda_.7} parent=5 // pred_fallthru
      _
    %p434 = scmp.le.s32.totalorder 2, %s9
    // Predicated region
    $region37: #{_lambda_.7} parent=5 // pred_check
      %p435 = pneg %p434
    $region38: #{_lambda_.7} parent=5 // pred_check_branch
      %437 = sbr.rel (%p435) target = $region40
    $region39: #{_lambda_.7} parent=5 // pred_region
      %s438 = ssub.s32 %s9, 2
      // Predicated region
      $region41: #{_lambda_.7} parent=39 // pred_check
        %p439 = pneg %p106
      $region42: #{_lambda_.7} parent=39 // pred_check_branch
        %441 = sbr.rel (%p439) target = $region44
      $region43: #{_lambda_.7} parent=39 // pred_region
        %s442 = smul.u32 8, %s15
        %p443 = scmp.lt.s32.totalorder %s442, 15
        %s444 = scalar_select %p443, %s442, 15
        %s445 = smul.addr %s444, 8
        %s446 = scalar_lea.vmem %s3, %s445
      $region44: #{_lambda_.7} parent=39 // pred_fallthru
        _
    $region40: #{_lambda_.7} parent=5 // pred_fallthru
      _
  $region6: #{_lambda_.7} parent=0 // loop_footer
    %s13 = sadd.s32 1, %s9
  $region7: #{_lambda_.7} parent=0 // loop_footer_branch
    %8 = sbr.rel target = $region3
  $region8: #{_lambda_.7} parent=0 // loop_exit
    _

// kernel: _lambda_.8
$region0: #{_lambda_.8}
  #allocation0 [shape = 'u32[]', space=smem, size = 0x4, offset = 0x4, fixed_abs, tag = 'smem constant byte address 0x4 - core index']
  #allocation1 [shape = 'u32[72,128]{1,0:T(1,128)}', space=vmem, size = 0x9000, scoped, tag = 'internal scratch']
  %s0 = inlined_call_operand.vmem [shape: bf16[16,216], index: 0, kind: input, shape index: {}]
  %s1 = inlined_call_operand.vmem [shape: bf16[216,128], index: 1, kind: input, shape index: {}]
  %s2 = inlined_call_operand.vmem [shape: f32[1,128], index: 2, kind: input, shape index: {}]
  %s3 = inlined_call_operand.vmem [shape: f32[16,128], index: 3, kind: output, shape index: {}]
  %s4 = sld [smem:[#allocation0]]
  $region45: #{_lambda_.8} parent=0
    _
  %s6 = ssub.s32 1, %s4
  %s7 = scalar_select 0, %s6, %s4
  loop: start=0, step=1, limit=4
  $region2: #{_lambda_.8} parent=0 // loop_pre_header
    _
  $region3: #{_lambda_.8} parent=0 // loop_header
    %s9 = sphi 0, %s13
    %p10 = scmp.ge.s32.totalorder %s9, 4
    %s19 = sphi 0, %s21
    %s22 = sphi 0, %s19
    %s23 = sphi 0, %s22
    %s39 = sphi 0, %s23
    %s43 = sphi 0, %s43
    %s45 = sphi 0, %s43
    %s46 = sphi 0, %s45
    %s60 = sphi 0, %s46
    %s64 = sphi 0, %s64
    %s66 = sphi 0, %s64
    %s67 = sphi 0, %s66
    %s81 = sphi 0, %s67
    %s87 = sphi 0, %s89
    %s90 = sphi 0, %s87
    %s91 = sphi 0, %s90
    %s107 = sphi 0, %s91
  $region4: #{_lambda_.8} parent=0 // loop_header_branch
    %12 = sbr.rel (%p10) target = $region8
  $region5: #{_lambda_.8} parent=0 // loop_body
    %s14 = ssub.s32 %s9, 1
    %s15 = ssub.s32 %s9, 2
    %s16 = sadd.s32 %s9, 1
    %s17 = ssub.s32 %s9, %s16
    %p18 = scmp.eq.s32.totalorder %s17, 0
    %s20 = sadd.s32 %s19, 1
    %s21 = scalar_select %p18, %s19, %s20
    %p24 = pneg %p18
    %p25 = scmp.eq.s32.totalorder %s9, 1
    %p26 = por %p24, %p25
    %p27 = scmp.ne.s32.totalorder %s19, %s22
    %p28 = scmp.eq.s32.totalorder %s9, 0
    %p29 = por %p27, %p28
    %p30 = scmp.ne.s32.totalorder %s19, %s22
    %p31 = scmp.eq.s32.totalorder %s14, 1
    %p32 = por %p30, %p31
    %p33 = scmp.ne.s32.totalorder %s22, %s23
    %p34 = scmp.eq.s32.totalorder %s14, 0
    %p35 = por %p33, %p34
    %p36 = scmp.ne.s32.totalorder %s22, %s23
    %p37 = scmp.eq.s32.totalorder %s15, 1
    %p38 = por %p36, %p37
    %p40 = scmp.ne.s32.totalorder %s23, %s39
    %p41 = scmp.eq.s32.totalorder %s15, 0
    %p42 = por %p40, %p41
    %s44 = sadd.s32 %s43, 1
    %p47 = scmp.eq.s32.totalorder %s9, 1
    %p48 = scmp.ne.s32.totalorder %s43, %s45
    %p49 = scmp.eq.s32.totalorder %s9, 0
    %p50 = por %p48, %p49
    %p51 = scmp.ne.s32.totalorder %s43, %s45
    %p52 = scmp.eq.s32.totalorder %s14, 1
    %p53 = por %p51, %p52
    %p54 = scmp.ne.s32.totalorder %s45, %s46
    %p55 = scmp.eq.s32.totalorder %s14, 0
    %p56 = por %p54, %p55
    %p57 = scmp.ne.s32.totalorder %s45, %s46
    %p58 = scmp.eq.s32.totalorder %s15, 1
    %p59 = por %p57, %p58
    %p61 = scmp.ne.s32.totalorder %s46, %s60
    %p62 = scmp.eq.s32.totalorder %s15, 0
    %p63 = por %p61, %p62
    %s65 = sadd.s32 %s64, 1
    %p68 = scmp.eq.s32.totalorder %s9, 1
    %p69 = scmp.ne.s32.totalorder %s64, %s66
    %p70 = scmp.eq.s32.totalorder %s9, 0
    %p71 = por %p69, %p70
    %p72 = scmp.ne.s32.totalorder %s64, %s66
    %p73 = scmp.eq.s32.totalorder %s14, 1
    %p74 = por %p72, %p73
    %p75 = scmp.ne.s32.totalorder %s66, %s67
    %p76 = scmp.eq.s32.totalorder %s14, 0
    %p77 = por %p75, %p76
    %p78 = scmp.ne.s32.totalorder %s66, %s67
    %p79 = scmp.eq.s32.totalorder %s15, 1
    %p80 = por %p78, %p79
    %p82 = scmp.ne.s32.totalorder %s67, %s81
    %p83 = scmp.eq.s32.totalorder %s15, 0
    %p84 = por %p82, %p83
    %s85 = ssub.s32 %s9, %s16
    %p86 = scmp.eq.s32.totalorder %s85, 0
    %s88 = sadd.s32 %s87, 1
    %s89 = scalar_select %p86, %s87, %s88
    %p92 = pneg %p86
    %p93 = scmp.eq.s32.totalorder %s9, 1
    %p94 = por %p92, %p93
    %p95 = scmp.ne.s32.totalorder %s87, %s90
    %p96 = scmp.eq.s32.totalorder %s9, 0
    %p97 = por %p95, %p96
    %p98 = scmp.ne.s32.totalorder %s87, %s90
    %p99 = scmp.eq.s32.totalorder %s14, 1
    %p100 = por %p98, %p99
    %p101 = scmp.ne.s32.totalorder %s90, %s91
    %p102 = scmp.eq.s32.totalorder %s14, 0
    %p103 = por %p101, %p102
    %p104 = scmp.ne.s32.totalorder %s90, %s91
    %p105 = scmp.eq.s32.totalorder %s15, 1
    %p106 = por %p104, %p105
    %p108 = scmp.ne.s32.totalorder %s91, %s107
    %p109 = scmp.eq.s32.totalorder %s15, 0
    %p110 = por %p108, %p109
    %p111 = scmp.le.s32.totalorder 1, %s9
    %p112 = scmp.lt.s32.totalorder %s9, 3
    %p113 = pnand %p111, %p112
    %p114 = pneg %p113
    // Predicated region
    $region9: #{_lambda_.8} parent=5 // pred_check
      _
    $region10: #{_lambda_.8} parent=5 // pred_check_branch
      %116 = sbr.rel (%p113) target = $region12
    $region11: #{_lambda_.8} parent=5 // pred_region
      %s117 = ssub.s32 %s9, 1
      // Predicated region
      $region13: #{_lambda_.8} parent=11 // pred_check
        %p118 = pneg %p56
      $region14: #{_lambda_.8} parent=11 // pred_check_branch
        %120 = sbr.rel (%p118) target = $region16
      $region15: #{_lambda_.8} parent=11 // pred_region
        _
      $region16: #{_lambda_.8} parent=11 // pred_fallthru
        _
      // Predicated region
      $region17: #{_lambda_.8} parent=11 // pred_check
        %p121 = pneg %p77
      $region18: #{_lambda_.8} parent=11 // pred_check_branch
        %123 = sbr.rel (%p121) target = $region20
      $region19: #{_lambda_.8} parent=11 // pred_region
        _
      $region20: #{_lambda_.8} parent=11 // pred_fallthru
        _
    $region12: #{_lambda_.8} parent=5 // pred_fallthru
      _
    %p124 = scmp.lt.s32.totalorder %s9, 2
    // Predicated region
    $region21: #{_lambda_.8} parent=5 // pred_check
      %p125 = pneg %p124
    $region22: #{_lambda_.8} parent=5 // pred_check_branch
      %127 = sbr.rel (%p125) target = $region24
    $region23: #{_lambda_.8} parent=5 // pred_region
      // Predicated region
      $region25: #{_lambda_.8} parent=23 // pred_check
        %p128 = pneg %p29
      $region26: #{_lambda_.8} parent=23 // pred_check_branch
        %130 = sbr.rel (%p128) target = $region28
      $region27: #{_lambda_.8} parent=23 // pred_region
        %p131 = scmp.lt.s32.totalorder %s9, 1
        %s132 = scalar_select %p131, %s9, 1
        %s133 = smul.addr %s132, 2
        %s134 = smul.addr %s133, 4
        %s135 = scalar_lea.vmem %s0, %s134
      $region28: #{_lambda_.8} parent=23 // pred_fallthru
        _
    $region24: #{_lambda_.8} parent=5 // pred_fallthru
      _
    %p136 = scmp.le.s32.totalorder 1, %s9
    %p137 = scmp.lt.s32.totalorder %s9, 3
    %p138 = pnand %p136, %p137
    %p139 = pneg %p138
    // Predicated region
    $region29: #{_lambda_.8} parent=5 // pred_check
      _
    $region30: #{_lambda_.8} parent=5 // pred_check_branch
      %141 = sbr.rel (%p138) target = $region32
    $region31: #{_lambda_.8} parent=5 // pred_region
      %s142 = ssub.s32 %s9, 1
      %p143 = scmp.lt.s32.totalorder %s14, 1
      %s144 = scalar_select %p143, %s14, 1
      %s145 = smul.addr %s144, 2
      %s146 = smul.addr %s145, 4
      %s147 = scalar_lea.vmem %s0, %s146
      %p148 = pneg %p35
      %p149 = pneg %p32
      %p150 = pneg %p56
      %p151 = pneg %p53
      %p152 = pneg %p77
      %p153 = pneg %p74
      %p154 = pneg %p103
      %p155 = pneg %p100
      %p156 = scmp.lt.s32.totalorder %s14, 1
      %s157 = scalar_select %p156, %s14, 1
      %s158 = smul.addr %s157, 8
      %s159 = scalar_lea.vmem %s3, %s158
      %p160 = scmp.lt.s32.totalorder %s14, 1
      %s161 = scalar_select %p160, %s14, 1
      %s162 = smul.addr %s161, 2
      %s163 = smul.addr %s162, 4
      %s164 = scalar_lea.vmem %s0, %s163
      %p165 = scmp.lt.s32.totalorder %s14, 1
      %s166 = scalar_select %p165, %s14, 1
      %s167 = smul.addr %s166, 8
      %s168 = scalar_lea.vmem %s3, %s167
      %v170 = vld [vmem:[%s164] sm:$0xff]
      %v171 = vld [vmem:[%s1] sm:$0xf]
      %v172 = vld [vmem:[%s1 + $0x4] sm:$0xf]
      %v173 = vld [vmem:[%s1 + $0x8] sm:$0xf]
      %v174 = vld [vmem:[%s1 + $0xc] sm:$0xf]
      %v175 = vld [vmem:[%s1 + $0x10] sm:$0xf]
      %v176 = vld [vmem:[%s1 + $0x14] sm:$0xf]
      %v177 = vld [vmem:[%s1 + $0x18] sm:$0xf]
      %v178 = vld [vmem:[%s1 + $0x1c] sm:$0xf]
      %v179 = vld [vmem:[%s1 + $0x20] sm:$0xf]
      %v180 = vld [vmem:[%s1 + $0x24] sm:$0xf]
      %v181 = vld [vmem:[%s1 + $0x28] sm:$0xf]
      %v182 = vld [vmem:[%s1 + $0x2c] sm:$0xf]
      %v183 = vld [vmem:[%s1 + $0x30] sm:$0xf]
      %v184 = vld [vmem:[%s1 + $0x34] sm:$0xf]
      %v185 = vld [vmem:[%s1 + $0x38] sm:$0xf]
      %v186 = vld [vmem:[%s1 + $0x3c] sm:$0xf]
      %v187 = vld [vmem:[%s1 + $0x40] sm:$0xf]
      %v188 = vld [vmem:[%s1 + $0x44] sm:$0xf]
      %v189 = vld [vmem:[%s1 + $0x48] sm:$0xf]
      %v190 = vld [vmem:[%s1 + $0x4c] sm:$0xf]
      %v191 = vld [vmem:[%s1 + $0x50] sm:$0xf]
      %v192 = vld [vmem:[%s1 + $0x54] sm:$0xf]
      %v193 = vld [vmem:[%s1 + $0x58] sm:$0xf]
      %v194 = vld [vmem:[%s1 + $0x5c] sm:$0xf]
      %v195 = vld [vmem:[%s1 + $0x60] sm:$0xf]
      %v196 = vld [vmem:[%s1 + $0x64] sm:$0xf]
      %v197 = vld [vmem:[%s1 + $0x68] sm:$0xf]
      %v198 = vld [vmem:[%s2] sm:$0x1]
      %v200 = vperm.slane %v198, 0
      %v203 = vunpack.c.l.b16 %v170
      %v204 = vunpack.c.h.b16 %v170
      %v205 = vpack.c.b16 %v203, %v203
      %v206 = vpack.c.b16 %v204, %v204
      %v235 = vunpack.c.l.b16 %v171
      %v236 = vunpack.c.l.b16 %v172
      %v237 = vunpack.c.l.b16 %v173
      %v238 = vunpack.c.l.b16 %v174
      %v239 = vunpack.c.l.b16 %v175
      %v240 = vunpack.c.l.b16 %v176
      %v241 = vunpack.c.l.b16 %v177
      %v242 = vunpack.c.l.b16 %v178
      %v243 = vunpack.c.l.b16 %v179
      %v244 = vunpack.c.l.b16 %v180
      %v245 = vunpack.c.l.b16 %v181
      %v246 = vunpack.c.l.b16 %v182
      %v247 = vunpack.c.l.b16 %v183
      %v248 = vunpack.c.l.b16 %v184
      %v249 = vunpack.c.l.b16 %v185
      %v250 = vunpack.c.l.b16 %v186
      %v251 = vunpack.c.l.b16 %v187
      %v252 = vunpack.c.l.b16 %v188
      %v253 = vunpack.c.l.b16 %v189
      %v254 = vunpack.c.l.b16 %v190
      %v255 = vunpack.c.l.b16 %v191
      %v256 = vunpack.c.l.b16 %v192
      %v257 = vunpack.c.l.b16 %v193
      %v258 = vunpack.c.l.b16 %v194
      %v259 = vunpack.c.l.b16 %v195
      %v260 = vunpack.c.l.b16 %v196
      %v261 = vunpack.c.l.b16 %v197
      %v262 = vpack.c.b16 %v236, %v235
      %v263 = vpack.c.b16 %v238, %v237
      %v264 = vpack.c.b16 %v240, %v239
      %v265 = vpack.c.b16 %v242, %v241
      %v266 = vpack.c.b16 %v244, %v243
      %v267 = vpack.c.b16 %v246, %v245
      %v268 = vpack.c.b16 %v248, %v247
      %v269 = vpack.c.b16 %v250, %v249
      %v270 = vpack.c.b16 %v252, %v251
      %v271 = vpack.c.b16 %v254, %v253
      %v272 = vpack.c.b16 %v256, %v255
      %v273 = vpack.c.b16 %v258, %v257
      %v274 = vpack.c.b16 %v260, %v259
      %v275 = vpack.c.b16 %v261, %v261
      %vm289 = vcmask 719872
      %v291 = vsel %vm289, %v206, 0
      %vm293 = vcmask 1043456
      %v295 = vsel %vm293, %v275, 0
      %297 = vmatpush.bf16.msra.mxu0 %v269
      %298 = vmatpush.bf16.msra.mxu0 %v268
      %299 = vmatpush.bf16.msra.mxu0 %v267
      %300 = vmatpush.bf16.msra.mxu0 %v266
      %301 = vmatpush.bf16.msra.mxu0 %v265
      %302 = vmatpush.bf16.msra.mxu0 %v264
      %303 = vmatpush.bf16.msra.mxu0 %v263
      %304 = vmatpush.bf16.msra.mxu0 %v262
      %305 = vmatmul.bf16.gmra.mxu0 %v205
      %v306 = vpop.f32.mrf.mxu0
      %v307 = vadd.f32 %v200, %v306
      %v308 = vpop.f32.mrf.mxu0
      %309 = vdwg.mxu0
      %310 = vmatpush.bf16.msra.mxu0 0
      %311 = vmatpush.bf16.msra.mxu0 0
      %312 = vmatpush.bf16.msra.mxu0 %v295
      %313 = vmatpush.bf16.msra.mxu0 %v274
      %314 = vmatpush.bf16.msra.mxu0 %v273
      %315 = vmatpush.bf16.msra.mxu0 %v272
      %316 = vmatpush.bf16.msra.mxu0 %v271
      %317 = vmatpush.bf16.msra.mxu0 %v270
      %318 = vmatmul.bf16.gmra.mxu0 %v291
      %v319 = vpop.f32.mrf.mxu0
      %v320 = vadd.f32 %v307, %v319
      %v321 = vpop.f32.mrf.mxu0
      %322 = vdwg.mxu0
      %v323 = vmax.f32 %v320, 0.0
      %324 = vst [vmem:[%s168] sm:$0xff] %v323
      %p325 = scmp.lt.s32.totalorder %s14, 1
      %s326 = scalar_select %p325, %s14, 1
      %s327 = smul.addr %s326, 8
      %s328 = scalar_lea.vmem %s3, %s327
      // Predicated region
      $region33: #{_lambda_.8} parent=31 // pred_check
        %p329 = pneg %p100
      $region34: #{_lambda_.8} parent=31 // pred_check_branch
        %331 = sbr.rel (%p329) target = $region36
      $region35: #{_lambda_.8} parent=31 // pred_region
        _
      $region36: #{_lambda_.8} parent=31 // pred_fallthru
        _
    $region32: #{_lambda_.8} parent=5 // pred_fallthru
      _
    %p332 = scmp.le.s32.totalorder 2, %s9
    // Predicated region
    $region37: #{_lambda_.8} parent=5 // pred_check
      %p333 = pneg %p332
    $region38: #{_lambda_.8} parent=5 // pred_check_branch
      %335 = sbr.rel (%p333) target = $region40
    $region39: #{_lambda_.8} parent=5 // pred_region
      %s336 = ssub.s32 %s9, 2
      // Predicated region
      $region41: #{_lambda_.8} parent=39 // pred_check
        %p337 = pneg %p106
      $region42: #{_lambda_.8} parent=39 // pred_check_branch
        %339 = sbr.rel (%p337) target = $region44
      $region43: #{_lambda_.8} parent=39 // pred_region
        %p340 = scmp.lt.s32.totalorder %s15, 1
        %s341 = scalar_select %p340, %s15, 1
        %s342 = smul.addr %s341, 8
        %s343 = scalar_lea.vmem %s3, %s342
      $region44: #{_lambda_.8} parent=39 // pred_fallthru
        _
    $region40: #{_lambda_.8} parent=5 // pred_fallthru
      _
  $region6: #{_lambda_.8} parent=0 // loop_footer
    %s13 = sadd.s32 1, %s9
  $region7: #{_lambda_.8} parent=0 // loop_footer_branch
    %8 = sbr.rel target = $region3
  $region8: #{_lambda_.8} parent=0 // loop_exit
    _

// kernel: tile.23
$region0: #{tile.23}
  #allocation0 [shape = 's32[1]{0}', space=sflag, size = 0x4, scoped, tag = 'scoped memory for tile.23']
  %s0 = inlined_call_operand.vmem [shape: f32[8], index: 0, kind: input, shape index: {}]
  %s1 = inlined_call_operand.vmem [shape: f32[8,8], index: 1, kind: output, shape index: {}]
  // Predicated region
  $region2: #{tile.23} parent=0 // pred_check
    _
  $region3: #{tile.23} parent=0 // pred_check_branch
    %3 = sbr.rel (0) target = $region5
  $region4: #{tile.23} parent=0 // pred_region
    _
  $region5: #{tile.23} parent=0 // pred_fallthru
    _
  %v4 = vld [vmem:[%s0] ss:$0 sm:$0xff]
  %5 = vst [vmem:[%s1] sm:$0xff] %v4

// kernel: mul.41
$region0: #{mul.41}
  %s0 = inlined_call_operand.vmem [shape: f32[8,8], index: 0, kind: input, shape index: {}]
  %s1 = inlined_call_operand.vmem [shape: f32[64], index: 1, kind: output, shape index: {}]
  $region1: #{mul.41} parent=0
    #allocation0 [shape = 'u8[4096]{0}', space=vmem, size = 0x1000, scoped, tag = 'scoped mem for output reshape']
    %v2 = vld [vmem:[%s0] sm:$0x1]
    %vm3 = vcmask 64512
    %4 = vst.msk [vmem:[#allocation0] sm:$0x1] %vm3, %v2
    %s5 = scalar_lea.vmem %s0, 7
    %v6 = vld [vmem:[%s5] sm:$0x1]
    %7 = vrot.lane.b32.xlu0 %v6, 56
    %v8 = vpop.permute.xlu0 %7
    %vm9 = vcmask 523712
    %10 = vst.msk [vmem:[#allocation0] sm:$0x1] %vm9, %v8
    %s11 = scalar_lea.vmem %s0, 6
    %v12 = vld [vmem:[%s11] sm:$0x1]
    %13 = vrot.lane.b32.xlu0 %v12, 48
    %v14 = vpop.permute.xlu0 %13
    %vm15 = vcmask 458112
    %16 = vst.msk [vmem:[#allocation0] sm:$0x1] %vm15, %v14
    %s17 = scalar_lea.vmem %s0, 5
    %v18 = vld [vmem:[%s17] sm:$0x1]
    %19 = vrot.lane.b32.xlu0 %v18, 40
    %v20 = vpop.permute.xlu0 %19
    %vm21 = vcmask 392512
    %22 = vst.msk [vmem:[#allocation0] sm:$0x1] %vm21, %v20
    %s23 = scalar_lea.vmem %s0, 4
    %v24 = vld [vmem:[%s23] sm:$0x1]
    %25 = vrot.lane.b32.xlu0 %v24, 32
    %v26 = vpop.permute.xlu0 %25
    %vm27 = vcmask 326912
    %28 = vst.msk [vmem:[#allocation0] sm:$0x1] %vm27, %v26
    %s29 = scalar_lea.vmem %s0, 3
    %v30 = vld [vmem:[%s29] sm:$0x1]
    %31 = vrot.lane.b32.xlu0 %v30, 24
    %v32 = vpop.permute.xlu0 %31
    %vm33 = vcmask 261312
    %34 = vst.msk [vmem:[#allocation0] sm:$0x1] %vm33, %v32
    %s35 = scalar_lea.vmem %s0, 2
    %v36 = vld [vmem:[%s35] sm:$0x1]
    %37 = vrot.lane.b32.xlu0 %v36, 16
    %v38 = vpop.permute.xlu0 %37
    %vm39 = vcmask 195712
    %40 = vst.msk [vmem:[#allocation0] sm:$0x1] %vm39, %v38
    %s41 = scalar_lea.vmem %s0, 1
    %v42 = vld [vmem:[%s41] sm:$0x1]
    %43 = vrot.lane.b32.xlu0 %v42, 8
    %v44 = vpop.permute.xlu0 %43
    %vm45 = vcmask 130112
    %46 = vst.msk [vmem:[#allocation0] sm:$0x1] %vm45, %v44
    %s48 = ssub.s32 2, 1
    %v49 = vld [vmem:[#allocation0] sm:%s48]
    %s51 = ssub.s32 2, 1
    %52 = vst [vmem:[%s1] sm:%s51] %v49

// kernel: tile.29
$region0: #{tile.29}
  %s0 = inlined_call_operand.vmem [shape: f32[8,8], index: 0, kind: input, shape index: {}]
  %s1 = inlined_call_operand.vmem [shape: f32[1,64], index: 1, kind: output, shape index: {}]
  $region1: #{tile.29} parent=0
    #allocation0 [shape = 'u8[4096]{0}', space=vmem, size = 0x1000, scoped, tag = 'scoped mem for output reshape']
    %v2 = vld [vmem:[%s0] sm:$0x1]
    %vm3 = vcmask 64512
    %4 = vst.msk [vmem:[#allocation0] sm:$0x1] %vm3, %v2
    %s5 = scalar_lea.vmem %s0, 7
    %v6 = vld [vmem:[%s5] sm:$0x1]
    %7 = vrot.lane.b32.xlu0 %v6, 56
    %v8 = vpop.permute.xlu0 %7
    %vm9 = vcmask 523712
    %10 = vst.msk [vmem:[#allocation0] sm:$0x1] %vm9, %v8
    %s11 = scalar_lea.vmem %s0, 6
    %v12 = vld [vmem:[%s11] sm:$0x1]
    %13 = vrot.lane.b32.xlu0 %v12, 48
    %v14 = vpop.permute.xlu0 %13
    %vm15 = vcmask 458112
    %16 = vst.msk [vmem:[#allocation0] sm:$0x1] %vm15, %v14
    %s17 = scalar_lea.vmem %s0, 5
    %v18 = vld [vmem:[%s17] sm:$0x1]
    %19 = vrot.lane.b32.xlu0 %v18, 40
    %v20 = vpop.permute.xlu0 %19
    %vm21 = vcmask 392512
    %22 = vst.msk [vmem:[#allocation0] sm:$0x1] %vm21, %v20
    %s23 = scalar_lea.vmem %s0, 4
    %v24 = vld [vmem:[%s23] sm:$0x1]
    %25 = vrot.lane.b32.xlu0 %v24, 32
    %v26 = vpop.permute.xlu0 %25
    %vm27 = vcmask 326912
    %28 = vst.msk [vmem:[#allocation0] sm:$0x1] %vm27, %v26
    %s29 = scalar_lea.vmem %s0, 3
    %v30 = vld [vmem:[%s29] sm:$0x1]
    %31 = vrot.lane.b32.xlu0 %v30, 24
    %v32 = vpop.permute.xlu0 %31
    %vm33 = vcmask 261312
    %34 = vst.msk [vmem:[#allocation0] sm:$0x1] %vm33, %v32
    %s35 = scalar_lea.vmem %s0, 2
    %v36 = vld [vmem:[%s35] sm:$0x1]
    %37 = vrot.lane.b32.xlu0 %v36, 16
    %v38 = vpop.permute.xlu0 %37
    %vm39 = vcmask 195712
    %40 = vst.msk [vmem:[#allocation0] sm:$0x1] %vm39, %v38
    %s41 = scalar_lea.vmem %s0, 1
    %v42 = vld [vmem:[%s41] sm:$0x1]
    %43 = vrot.lane.b32.xlu0 %v42, 8
    %v44 = vpop.permute.xlu0 %43
    %vm45 = vcmask 130112
    %46 = vst.msk [vmem:[#allocation0] sm:$0x1] %vm45, %v44
    %s48 = ssub.s32 2, 1
    %v49 = vld [vmem:[#allocation0] sm:%s48]
    %s51 = ssub.s32 2, 1
    %52 = vst [vmem:[%s1] sm:%s51] %v49

// kernel: _lambda_.10
$region0: #{_lambda_.10}
  #allocation0 [shape = 'u32[]', space=smem, size = 0x4, offset = 0x4, fixed_abs, tag = 'smem constant byte address 0x4 - core index']
  #allocation1 [shape = 'u32[72,128]{1,0:T(1,128)}', space=vmem, size = 0x9000, scoped, tag = 'internal scratch']
  %s0 = inlined_call_operand.vmem [shape: bf16[16,64], index: 0, kind: input, shape index: {}]
  %s1 = inlined_call_operand.vmem [shape: bf16[64,128], index: 1, kind: input, shape index: {}]
  %s2 = inlined_call_operand.vmem [shape: f32[1,128], index: 2, kind: input, shape index: {}]
  %s3 = inlined_call_operand.vmem [shape: f32[16,128], index: 3, kind: input, shape index: {}]
  %s4 = inlined_call_operand.vmem [shape: f32[16,128], index: 4, kind: output, shape index: {}]
  %s5 = sld [smem:[#allocation0]]
  $region49: #{_lambda_.10} parent=0
    _
  %s7 = ssub.s32 1, %s5
  %s8 = scalar_select 0, %s7, %s5
  loop: start=0, step=1, limit=4
  $region2: #{_lambda_.10} parent=0 // loop_pre_header
    _
  $region3: #{_lambda_.10} parent=0 // loop_header
    %s10 = sphi 0, %s14
    %p11 = scmp.ge.s32.totalorder %s10, 4
    %s20 = sphi 0, %s22
    %s23 = sphi 0, %s20
    %s24 = sphi 0, %s23
    %s40 = sphi 0, %s24
    %s44 = sphi 0, %s44
    %s46 = sphi 0, %s44
    %s47 = sphi 0, %s46
    %s61 = sphi 0, %s47
    %s65 = sphi 0, %s65
    %s67 = sphi 0, %s65
    %s68 = sphi 0, %s67
    %s82 = sphi 0, %s68
    %s88 = sphi 0, %s90
    %s91 = sphi 0, %s88
    %s92 = sphi 0, %s91
    %s108 = sphi 0, %s92
    %s114 = sphi 0, %s116
    %s117 = sphi 0, %s114
    %s118 = sphi 0, %s117
    %s134 = sphi 0, %s118
  $region4: #{_lambda_.10} parent=0 // loop_header_branch
    %13 = sbr.rel (%p11) target = $region8
  $region5: #{_lambda_.10} parent=0 // loop_body
    %s15 = ssub.s32 %s10, 1
    %s16 = ssub.s32 %s10, 2
    %s17 = sadd.s32 %s10, 1
    %s18 = ssub.s32 %s10, %s17
    %p19 = scmp.eq.s32.totalorder %s18, 0
    %s21 = sadd.s32 %s20, 1
    %s22 = scalar_select %p19, %s20, %s21
    %p25 = pneg %p19
    %p26 = scmp.eq.s32.totalorder %s10, 1
    %p27 = por %p25, %p26
    %p28 = scmp.ne.s32.totalorder %s20, %s23
    %p29 = scmp.eq.s32.totalorder %s10, 0
    %p30 = por %p28, %p29
    %p31 = scmp.ne.s32.totalorder %s20, %s23
    %p32 = scmp.eq.s32.totalorder %s15, 1
    %p33 = por %p31, %p32
    %p34 = scmp.ne.s32.totalorder %s23, %s24
    %p35 = scmp.eq.s32.totalorder %s15, 0
    %p36 = por %p34, %p35
    %p37 = scmp.ne.s32.totalorder %s23, %s24
    %p38 = scmp.eq.s32.totalorder %s16, 1
    %p39 = por %p37, %p38
    %p41 = scmp.ne.s32.totalorder %s24, %s40
    %p42 = scmp.eq.s32.totalorder %s16, 0
    %p43 = por %p41, %p42
    %s45 = sadd.s32 %s44, 1
    %p48 = scmp.eq.s32.totalorder %s10, 1
    %p49 = scmp.ne.s32.totalorder %s44, %s46
    %p50 = scmp.eq.s32.totalorder %s10, 0
    %p51 = por %p49, %p50
    %p52 = scmp.ne.s32.totalorder %s44, %s46
    %p53 = scmp.eq.s32.totalorder %s15, 1
    %p54 = por %p52, %p53
    %p55 = scmp.ne.s32.totalorder %s46, %s47
    %p56 = scmp.eq.s32.totalorder %s15, 0
    %p57 = por %p55, %p56
    %p58 = scmp.ne.s32.totalorder %s46, %s47
    %p59 = scmp.eq.s32.totalorder %s16, 1
    %p60 = por %p58, %p59
    %p62 = scmp.ne.s32.totalorder %s47, %s61
    %p63 = scmp.eq.s32.totalorder %s16, 0
    %p64 = por %p62, %p63
    %s66 = sadd.s32 %s65, 1
    %p69 = scmp.eq.s32.totalorder %s10, 1
    %p70 = scmp.ne.s32.totalorder %s65, %s67
    %p71 = scmp.eq.s32.totalorder %s10, 0
    %p72 = por %p70, %p71
    %p73 = scmp.ne.s32.totalorder %s65, %s67
    %p74 = scmp.eq.s32.totalorder %s15, 1
    %p75 = por %p73, %p74
    %p76 = scmp.ne.s32.totalorder %s67, %s68
    %p77 = scmp.eq.s32.totalorder %s15, 0
    %p78 = por %p76, %p77
    %p79 = scmp.ne.s32.totalorder %s67, %s68
    %p80 = scmp.eq.s32.totalorder %s16, 1
    %p81 = por %p79, %p80
    %p83 = scmp.ne.s32.totalorder %s68, %s82
    %p84 = scmp.eq.s32.totalorder %s16, 0
    %p85 = por %p83, %p84
    %s86 = ssub.s32 %s10, %s17
    %p87 = scmp.eq.s32.totalorder %s86, 0
    %s89 = sadd.s32 %s88, 1
    %s90 = scalar_select %p87, %s88, %s89
    %p93 = pneg %p87
    %p94 = scmp.eq.s32.totalorder %s10, 1
    %p95 = por %p93, %p94
    %p96 = scmp.ne.s32.totalorder %s88, %s91
    %p97 = scmp.eq.s32.totalorder %s10, 0
    %p98 = por %p96, %p97
    %p99 = scmp.ne.s32.totalorder %s88, %s91
    %p100 = scmp.eq.s32.totalorder %s15, 1
    %p101 = por %p99, %p100
    %p102 = scmp.ne.s32.totalorder %s91, %s92
    %p103 = scmp.eq.s32.totalorder %s15, 0
    %p104 = por %p102, %p103
    %p105 = scmp.ne.s32.totalorder %s91, %s92
    %p106 = scmp.eq.s32.totalorder %s16, 1
    %p107 = por %p105, %p106
    %p109 = scmp.ne.s32.totalorder %s92, %s108
    %p110 = scmp.eq.s32.totalorder %s16, 0
    %p111 = por %p109, %p110
    %s112 = ssub.s32 %s10, %s17
    %p113 = scmp.eq.s32.totalorder %s112, 0
    %s115 = sadd.s32 %s114, 1
    %s116 = scalar_select %p113, %s114, %s115
    %p119 = pneg %p113
    %p120 = scmp.eq.s32.totalorder %s10, 1
    %p121 = por %p119, %p120
    %p122 = scmp.ne.s32.totalorder %s114, %s117
    %p123 = scmp.eq.s32.totalorder %s10, 0
    %p124 = por %p122, %p123
    %p125 = scmp.ne.s32.totalorder %s114, %s117
    %p126 = scmp.eq.s32.totalorder %s15, 1
    %p127 = por %p125, %p126
    %p128 = scmp.ne.s32.totalorder %s117, %s118
    %p129 = scmp.eq.s32.totalorder %s15, 0
    %p130 = por %p128, %p129
    %p131 = scmp.ne.s32.totalorder %s117, %s118
    %p132 = scmp.eq.s32.totalorder %s16, 1
    %p133 = por %p131, %p132
    %p135 = scmp.ne.s32.totalorder %s118, %s134
    %p136 = scmp.eq.s32.totalorder %s16, 0
    %p137 = por %p135, %p136
    %p138 = scmp.le.s32.totalorder 1, %s10
    %p139 = scmp.lt.s32.totalorder %s10, 3
    %p140 = pnand %p138, %p139
    %p141 = pneg %p140
    // Predicated region
    $region9: #{_lambda_.10} parent=5 // pred_check
      _
    $region10: #{_lambda_.10} parent=5 // pred_check_branch
      %143 = sbr.rel (%p140) target = $region12
    $region11: #{_lambda_.10} parent=5 // pred_region
      %s144 = ssub.s32 %s10, 1
      // Predicated region
      $region13: #{_lambda_.10} parent=11 // pred_check
        %p145 = pneg %p57
      $region14: #{_lambda_.10} parent=11 // pred_check_branch
        %147 = sbr.rel (%p145) target = $region16
      $region15: #{_lambda_.10} parent=11 // pred_region
        _
      $region16: #{_lambda_.10} parent=11 // pred_fallthru
        _
      // Predicated region
      $region17: #{_lambda_.10} parent=11 // pred_check
        %p148 = pneg %p78
      $region18: #{_lambda_.10} parent=11 // pred_check_branch
        %150 = sbr.rel (%p148) target = $region20
      $region19: #{_lambda_.10} parent=11 // pred_region
        _
      $region20: #{_lambda_.10} parent=11 // pred_fallthru
        _
    $region12: #{_lambda_.10} parent=5 // pred_fallthru
      _
    %p151 = scmp.lt.s32.totalorder %s10, 2
    // Predicated region
    $region21: #{_lambda_.10} parent=5 // pred_check
      %p152 = pneg %p151
    $region22: #{_lambda_.10} parent=5 // pred_check_branch
      %154 = sbr.rel (%p152) target = $region24
    $region23: #{_lambda_.10} parent=5 // pred_region
      // Predicated region
      $region25: #{_lambda_.10} parent=23 // pred_check
        %p155 = pneg %p30
      $region26: #{_lambda_.10} parent=23 // pred_check_branch
        %157 = sbr.rel (%p155) target = $region28
      $region27: #{_lambda_.10} parent=23 // pred_region
        %p158 = scmp.lt.s32.totalorder %s10, 1
        %s159 = scalar_select %p158, %s10, 1
        %s160 = smul.addr %s159, 4
        %s161 = scalar_lea.vmem %s0, %s160
      $region28: #{_lambda_.10} parent=23 // pred_fallthru
        _
      // Predicated region
      $region29: #{_lambda_.10} parent=23 // pred_check
        %p162 = pneg %p98
      $region30: #{_lambda_.10} parent=23 // pred_check_branch
        %164 = sbr.rel (%p162) target = $region32
      $region31: #{_lambda_.10} parent=23 // pred_region
        %p165 = scmp.lt.s32.totalorder %s10, 1
        %s166 = scalar_select %p165, %s10, 1
        %s167 = smul.addr %s166, 8
        %s168 = scalar_lea.vmem %s3, %s167
      $region32: #{_lambda_.10} parent=23 // pred_fallthru
        _
    $region24: #{_lambda_.10} parent=5 // pred_fallthru
      _
    %p169 = scmp.le.s32.totalorder 1, %s10
    %p170 = scmp.lt.s32.totalorder %s10, 3
    %p171 = pnand %p169, %p170
    %p172 = pneg %p171
    // Predicated region
    $region33: #{_lambda_.10} parent=5 // pred_check
      _
    $region34: #{_lambda_.10} parent=5 // pred_check_branch
      %174 = sbr.rel (%p171) target = $region36
    $region35: #{_lambda_.10} parent=5 // pred_region
      %s175 = ssub.s32 %s10, 1
      %p176 = scmp.lt.s32.totalorder %s15, 1
      %s177 = scalar_select %p176, %s15, 1
      %s178 = smul.addr %s177, 4
      %s179 = scalar_lea.vmem %s0, %s178
      %p180 = pneg %p36
      %p181 = pneg %p33
      %p182 = pneg %p57
      %p183 = pneg %p54
      %p184 = pneg %p78
      %p185 = pneg %p75
      %p186 = scmp.lt.s32.totalorder %s15, 1
      %s187 = scalar_select %p186, %s15, 1
      %s188 = smul.addr %s187, 8
      %s189 = scalar_lea.vmem %s3, %s188
      %p190 = pneg %p104
      %p191 = pneg %p101
      %p192 = pneg %p130
      %p193 = pneg %p127
      %p194 = scmp.lt.s32.totalorder %s15, 1
      %s195 = scalar_select %p194, %s15, 1
      %s196 = smul.addr %s195, 8
      %s197 = scalar_lea.vmem %s4, %s196
      %p198 = scmp.lt.s32.totalorder %s15, 1
      %s199 = scalar_select %p198, %s15, 1
      %s200 = smul.addr %s199, 4
      %s201 = scalar_lea.vmem %s0, %s200
      %p202 = scmp.lt.s32.totalorder %s15, 1
      %s203 = scalar_select %p202, %s15, 1
      %s204 = smul.addr %s203, 8
      %s205 = scalar_lea.vmem %s3, %s204
      %p206 = scmp.lt.s32.totalorder %s15, 1
      %s207 = scalar_select %p206, %s15, 1
      %s208 = smul.addr %s207, 8
      %s209 = scalar_lea.vmem %s4, %s208
      %v211 = vld [vmem:[%s201] sm:$0xf]
      %v212 = vld [vmem:[%s1] sm:$0xf]
      %v213 = vld [vmem:[%s1 + $0x4] sm:$0xf]
      %v214 = vld [vmem:[%s1 + $0x8] sm:$0xf]
      %v215 = vld [vmem:[%s1 + $0xc] sm:$0xf]
      %v216 = vld [vmem:[%s1 + $0x10] sm:$0xf]
      %v217 = vld [vmem:[%s1 + $0x14] sm:$0xf]
      %v218 = vld [vmem:[%s1 + $0x18] sm:$0xf]
      %v219 = vld [vmem:[%s1 + $0x1c] sm:$0xf]
      %v220 = vld [vmem:[%s2] sm:$0x1]
      %v222 = vperm.slane %v220, 0
      %v232 = vunpack.c.l.b16 %v212
      %v233 = vunpack.c.l.b16 %v213
      %v234 = vunpack.c.l.b16 %v214
      %v235 = vunpack.c.l.b16 %v215
      %v236 = vunpack.c.l.b16 %v216
      %v237 = vunpack.c.l.b16 %v217
      %v238 = vunpack.c.l.b16 %v218
      %v239 = vunpack.c.l.b16 %v219
      %v240 = vpack.c.b16 %v233, %v232
      %v241 = vpack.c.b16 %v235, %v234
      %v242 = vpack.c.b16 %v237, %v236
      %v243 = vpack.c.b16 %v239, %v238
      %vm248 = vcmask 523264
      %v250 = vsel %vm248, %v211, 0
      %252 = vmatpush.bf16.msra.mxu0 0
      %253 = vmatpush.bf16.msra.mxu0 0
      %254 = vmatpush.bf16.msra.mxu0 0
      %255 = vmatpush.bf16.msra.mxu0 0
      %256 = vmatpush.bf16.msra.mxu0 %v243
      %257 = vmatpush.bf16.msra.mxu0 %v242
      %258 = vmatpush.bf16.msra.mxu0 %v241
      %259 = vmatpush.bf16.msra.mxu0 %v240
      %260 = vmatmul.bf16.gmra.mxu0 %v250
      %v261 = vpop.f32.mrf.mxu0
      %v262 = vadd.f32 %v222, %v261
      %v263 = vpop.f32.mrf.mxu0
      %264 = vdwg.mxu0
      %v265 = vld [vmem:[%s205] sm:$0xff]
      %v266 = vadd.f32 %v262, %v265
      %v267 = vmax.f32 %v266, 0.0
      %268 = vst [vmem:[%s209] sm:$0xff] %v267
      %p269 = scmp.lt.s32.totalorder %s15, 1
      %s270 = scalar_select %p269, %s15, 1
      %s271 = smul.addr %s270, 8
      %s272 = scalar_lea.vmem %s4, %s271
      // Predicated region
      $region37: #{_lambda_.10} parent=35 // pred_check
        %p273 = pneg %p127
      $region38: #{_lambda_.10} parent=35 // pred_check_branch
        %275 = sbr.rel (%p273) target = $region40
      $region39: #{_lambda_.10} parent=35 // pred_region
        _
      $region40: #{_lambda_.10} parent=35 // pred_fallthru
        _
    $region36: #{_lambda_.10} parent=5 // pred_fallthru
      _
    %p276 = scmp.le.s32.totalorder 2, %s10
    // Predicated region
    $region41: #{_lambda_.10} parent=5 // pred_check
      %p277 = pneg %p276
    $region42: #{_lambda_.10} parent=5 // pred_check_branch
      %279 = sbr.rel (%p277) target = $region44
    $region43: #{_lambda_.10} parent=5 // pred_region
      %s280 = ssub.s32 %s10, 2
      // Predicated region
      $region45: #{_lambda_.10} parent=43 // pred_check
        %p281 = pneg %p133
      $region46: #{_lambda_.10} parent=43 // pred_check_branch
        %283 = sbr.rel (%p281) target = $region48
      $region47: #{_lambda_.10} parent=43 // pred_region
        %p284 = scmp.lt.s32.totalorder %s16, 1
        %s285 = scalar_select %p284, %s16, 1
        %s286 = smul.addr %s285, 8
        %s287 = scalar_lea.vmem %s4, %s286
      $region48: #{_lambda_.10} parent=43 // pred_fallthru
        _
    $region44: #{_lambda_.10} parent=5 // pred_fallthru
      _
  $region6: #{_lambda_.10} parent=0 // loop_footer
    %s14 = sadd.s32 1, %s10
  $region7: #{_lambda_.10} parent=0 // loop_footer_branch
    %9 = sbr.rel target = $region3
  $region8: #{_lambda_.10} parent=0 // loop_exit
    _

// kernel: tile.33
$region0: #{tile.33}
  #allocation0 [shape = 's32[1]{0}', space=sflag, size = 0x4, scoped, tag = 'scoped memory for tile.33']
  %s0 = inlined_call_operand.vmem [shape: f32[4], index: 0, kind: input, shape index: {}]
  %s1 = inlined_call_operand.vmem [shape: f32[8,4], index: 1, kind: output, shape index: {}]
  // Predicated region
  $region2: #{tile.33} parent=0 // pred_check
    _
  $region3: #{tile.33} parent=0 // pred_check_branch
    %3 = sbr.rel (0) target = $region5
  $region4: #{tile.33} parent=0 // pred_region
    _
  $region5: #{tile.33} parent=0 // pred_fallthru
    _
  %v4 = vld [vmem:[%s0] ss:$0 sm:$0xff]
  %5 = vst [vmem:[%s1] sm:$0xff] %v4

// kernel: mul.45
$region0: #{mul.45}
  %s0 = inlined_call_operand.vmem [shape: f32[8,4], index: 0, kind: input, shape index: {}]
  %s1 = inlined_call_operand.vmem [shape: f32[32], index: 1, kind: output, shape index: {}]
  $region1: #{mul.45} parent=0
    #allocation0 [shape = 'u8[4096]{0}', space=vmem, size = 0x1000, scoped, tag = 'scoped mem for output reshape']
    %v2 = vld [vmem:[%s0] sm:$0x1]
    %vm3 = vcmask 31744
    %4 = vst.msk [vmem:[#allocation0] sm:$0x1] %vm3, %v2
    %s5 = scalar_lea.vmem %s0, 7
    %v6 = vld [vmem:[%s5] sm:$0x1]
    %7 = vrot.lane.b32.xlu0 %v6, 28
    %v8 = vpop.permute.xlu0 %7
    %vm9 = vcmask 261344
    %10 = vst.msk [vmem:[#allocation0] sm:$0x1] %vm9, %v8
    %s11 = scalar_lea.vmem %s0, 6
    %v12 = vld [vmem:[%s11] sm:$0x1]
    %13 = vrot.lane.b32.xlu0 %v12, 24
    %v14 = vpop.permute.xlu0 %13
    %vm15 = vcmask 228544
    %16 = vst.msk [vmem:[#allocation0] sm:$0x1] %vm15, %v14
    %s17 = scalar_lea.vmem %s0, 5
    %v18 = vld [vmem:[%s17] sm:$0x1]
    %19 = vrot.lane.b32.xlu0 %v18, 20
    %v20 = vpop.permute.xlu0 %19
    %vm21 = vcmask 195744
    %22 = vst.msk [vmem:[#allocation0] sm:$0x1] %vm21, %v20
    %s23 = scalar_lea.vmem %s0, 4
    %v24 = vld [vmem:[%s23] sm:$0x1]
    %25 = vrot.lane.b32.xlu0 %v24, 16
    %v26 = vpop.permute.xlu0 %25
    %vm27 = vcmask 162944
    %28 = vst.msk [vmem:[#allocation0] sm:$0x1] %vm27, %v26
    %s29 = scalar_lea.vmem %s0, 3
    %v30 = vld [vmem:[%s29] sm:$0x1]
    %31 = vrot.lane.b32.xlu0 %v30, 12
    %v32 = vpop.permute.xlu0 %31
    %vm33 = vcmask 130144
    %34 = vst.msk [vmem:[#allocation0] sm:$0x1] %vm33, %v32
    %s35 = scalar_lea.vmem %s0, 2
    %v36 = vld [vmem:[%s35] sm:$0x1]
    %37 = vrot.lane.b32.xlu0 %v36, 8
    %v38 = vpop.permute.xlu0 %37
    %vm39 = vcmask 97344
    %40 = vst.msk [vmem:[#allocation0] sm:$0x1] %vm39, %v38
    %s41 = scalar_lea.vmem %s0, 1
    %v42 = vld [vmem:[%s41] sm:$0x1]
    %43 = vrot.lane.b32.xlu0 %v42, 4
    %v44 = vpop.permute.xlu0 %43
    %vm45 = vcmask 64544
    %46 = vst.msk [vmem:[#allocation0] sm:$0x1] %vm45, %v44
    %s48 = ssub.s32 2, 1
    %v49 = vld [vmem:[#allocation0] sm:%s48]
    %s51 = ssub.s32 2, 1
    %52 = vst [vmem:[%s1] sm:%s51] %v49

// kernel: tile.39
$region0: #{tile.39}
  %s0 = inlined_call_operand.vmem [shape: f32[8,4], index: 0, kind: input, shape index: {}]
  %s1 = inlined_call_operand.vmem [shape: f32[1,32], index: 1, kind: output, shape index: {}]
  $region1: #{tile.39} parent=0
    #allocation0 [shape = 'u8[4096]{0}', space=vmem, size = 0x1000, scoped, tag = 'scoped mem for output reshape']
    %v2 = vld [vmem:[%s0] sm:$0x1]
    %vm3 = vcmask 31744
    %4 = vst.msk [vmem:[#allocation0] sm:$0x1] %vm3, %v2
    %s5 = scalar_lea.vmem %s0, 7
    %v6 = vld [vmem:[%s5] sm:$0x1]
    %7 = vrot.lane.b32.xlu0 %v6, 28
    %v8 = vpop.permute.xlu0 %7
    %vm9 = vcmask 261344
    %10 = vst.msk [vmem:[#allocation0] sm:$0x1] %vm9, %v8
    %s11 = scalar_lea.vmem %s0, 6
    %v12 = vld [vmem:[%s11] sm:$0x1]
    %13 = vrot.lane.b32.xlu0 %v12, 24
    %v14 = vpop.permute.xlu0 %13
    %vm15 = vcmask 228544
    %16 = vst.msk [vmem:[#allocation0] sm:$0x1] %vm15, %v14
    %s17 = scalar_lea.vmem %s0, 5
    %v18 = vld [vmem:[%s17] sm:$0x1]
    %19 = vrot.lane.b32.xlu0 %v18, 20
    %v20 = vpop.permute.xlu0 %19
    %vm21 = vcmask 195744
    %22 = vst.msk [vmem:[#allocation0] sm:$0x1] %vm21, %v20
    %s23 = scalar_lea.vmem %s0, 4
    %v24 = vld [vmem:[%s23] sm:$0x1]
    %25 = vrot.lane.b32.xlu0 %v24, 16
    %v26 = vpop.permute.xlu0 %25
    %vm27 = vcmask 162944
    %28 = vst.msk [vmem:[#allocation0] sm:$0x1] %vm27, %v26
    %s29 = scalar_lea.vmem %s0, 3
    %v30 = vld [vmem:[%s29] sm:$0x1]
    %31 = vrot.lane.b32.xlu0 %v30, 12
    %v32 = vpop.permute.xlu0 %31
    %vm33 = vcmask 130144
    %34 = vst.msk [vmem:[#allocation0] sm:$0x1] %vm33, %v32
    %s35 = scalar_lea.vmem %s0, 2
    %v36 = vld [vmem:[%s35] sm:$0x1]
    %37 = vrot.lane.b32.xlu0 %v36, 8
    %v38 = vpop.permute.xlu0 %37
    %vm39 = vcmask 97344
    %40 = vst.msk [vmem:[#allocation0] sm:$0x1] %vm39, %v38
    %s41 = scalar_lea.vmem %s0, 1
    %v42 = vld [vmem:[%s41] sm:$0x1]
    %43 = vrot.lane.b32.xlu0 %v42, 4
    %v44 = vpop.permute.xlu0 %43
    %vm45 = vcmask 64544
    %46 = vst.msk [vmem:[#allocation0] sm:$0x1] %vm45, %v44
    %s48 = ssub.s32 2, 1
    %v49 = vld [vmem:[#allocation0] sm:%s48]
    %s51 = ssub.s32 2, 1
    %52 = vst [vmem:[%s1] sm:%s51] %v49

// kernel: _lambda_.11
$region0: #{_lambda_.11}
  #allocation0 [shape = 'u32[]', space=smem, size = 0x4, offset = 0x4, fixed_abs, tag = 'smem constant byte address 0x4 - core index']
  #allocation1 [shape = 'u32[72,128]{1,0:T(1,128)}', space=vmem, size = 0x9000, scoped, tag = 'internal scratch']
  %s0 = inlined_call_operand.vmem [shape: bf16[128,64], index: 0, kind: input, shape index: {}]
  %s1 = inlined_call_operand.vmem [shape: bf16[64,128], index: 1, kind: input, shape index: {}]
  %s2 = inlined_call_operand.vmem [shape: f32[1,128], index: 2, kind: input, shape index: {}]
  %s3 = inlined_call_operand.vmem [shape: f32[128,128], index: 3, kind: output, shape index: {}]
  %s4 = sld [smem:[#allocation0]]
  $region45: #{_lambda_.11} parent=0
    _
  %s6 = ssub.s32 1, %s4
  %s7 = scalar_select 0, %s6, %s4
  loop: start=0, step=1, limit=4
  $region2: #{_lambda_.11} parent=0 // loop_pre_header
    _
  $region3: #{_lambda_.11} parent=0 // loop_header
    %s9 = sphi 0, %s13
    %p10 = scmp.ge.s32.totalorder %s9, 4
    %s19 = sphi 0, %s21
    %s22 = sphi 0, %s19
    %s23 = sphi 0, %s22
    %s39 = sphi 0, %s23
    %s43 = sphi 0, %s43
    %s45 = sphi 0, %s43
    %s46 = sphi 0, %s45
    %s60 = sphi 0, %s46
    %s64 = sphi 0, %s64
    %s66 = sphi 0, %s64
    %s67 = sphi 0, %s66
    %s81 = sphi 0, %s67
    %s87 = sphi 0, %s89
    %s90 = sphi 0, %s87
    %s91 = sphi 0, %s90
    %s107 = sphi 0, %s91
  $region4: #{_lambda_.11} parent=0 // loop_header_branch
    %12 = sbr.rel (%p10) target = $region8
  $region5: #{_lambda_.11} parent=0 // loop_body
    %s14 = ssub.s32 %s9, 1
    %s15 = ssub.s32 %s9, 2
    %s16 = sadd.s32 %s9, 1
    %s17 = ssub.s32 %s9, %s16
    %p18 = scmp.eq.s32.totalorder %s17, 0
    %s20 = sadd.s32 %s19, 1
    %s21 = scalar_select %p18, %s19, %s20
    %p24 = pneg %p18
    %p25 = scmp.eq.s32.totalorder %s9, 1
    %p26 = por %p24, %p25
    %p27 = scmp.ne.s32.totalorder %s19, %s22
    %p28 = scmp.eq.s32.totalorder %s9, 0
    %p29 = por %p27, %p28
    %p30 = scmp.ne.s32.totalorder %s19, %s22
    %p31 = scmp.eq.s32.totalorder %s14, 1
    %p32 = por %p30, %p31
    %p33 = scmp.ne.s32.totalorder %s22, %s23
    %p34 = scmp.eq.s32.totalorder %s14, 0
    %p35 = por %p33, %p34
    %p36 = scmp.ne.s32.totalorder %s22, %s23
    %p37 = scmp.eq.s32.totalorder %s15, 1
    %p38 = por %p36, %p37
    %p40 = scmp.ne.s32.totalorder %s23, %s39
    %p41 = scmp.eq.s32.totalorder %s15, 0
    %p42 = por %p40, %p41
    %s44 = sadd.s32 %s43, 1
    %p47 = scmp.eq.s32.totalorder %s9, 1
    %p48 = scmp.ne.s32.totalorder %s43, %s45
    %p49 = scmp.eq.s32.totalorder %s9, 0
    %p50 = por %p48, %p49
    %p51 = scmp.ne.s32.totalorder %s43, %s45
    %p52 = scmp.eq.s32.totalorder %s14, 1
    %p53 = por %p51, %p52
    %p54 = scmp.ne.s32.totalorder %s45, %s46
    %p55 = scmp.eq.s32.totalorder %s14, 0
    %p56 = por %p54, %p55
    %p57 = scmp.ne.s32.totalorder %s45, %s46
    %p58 = scmp.eq.s32.totalorder %s15, 1
    %p59 = por %p57, %p58
    %p61 = scmp.ne.s32.totalorder %s46, %s60
    %p62 = scmp.eq.s32.totalorder %s15, 0
    %p63 = por %p61, %p62
    %s65 = sadd.s32 %s64, 1
    %p68 = scmp.eq.s32.totalorder %s9, 1
    %p69 = scmp.ne.s32.totalorder %s64, %s66
    %p70 = scmp.eq.s32.totalorder %s9, 0
    %p71 = por %p69, %p70
    %p72 = scmp.ne.s32.totalorder %s64, %s66
    %p73 = scmp.eq.s32.totalorder %s14, 1
    %p74 = por %p72, %p73
    %p75 = scmp.ne.s32.totalorder %s66, %s67
    %p76 = scmp.eq.s32.totalorder %s14, 0
    %p77 = por %p75, %p76
    %p78 = scmp.ne.s32.totalorder %s66, %s67
    %p79 = scmp.eq.s32.totalorder %s15, 1
    %p80 = por %p78, %p79
    %p82 = scmp.ne.s32.totalorder %s67, %s81
    %p83 = scmp.eq.s32.totalorder %s15, 0
    %p84 = por %p82, %p83
    %s85 = ssub.s32 %s9, %s16
    %p86 = scmp.eq.s32.totalorder %s85, 0
    %s88 = sadd.s32 %s87, 1
    %s89 = scalar_select %p86, %s87, %s88
    %p92 = pneg %p86
    %p93 = scmp.eq.s32.totalorder %s9, 1
    %p94 = por %p92, %p93
    %p95 = scmp.ne.s32.totalorder %s87, %s90
    %p96 = scmp.eq.s32.totalorder %s9, 0
    %p97 = por %p95, %p96
    %p98 = scmp.ne.s32.totalorder %s87, %s90
    %p99 = scmp.eq.s32.totalorder %s14, 1
    %p100 = por %p98, %p99
    %p101 = scmp.ne.s32.totalorder %s90, %s91
    %p102 = scmp.eq.s32.totalorder %s14, 0
    %p103 = por %p101, %p102
    %p104 = scmp.ne.s32.totalorder %s90, %s91
    %p105 = scmp.eq.s32.totalorder %s15, 1
    %p106 = por %p104, %p105
    %p108 = scmp.ne.s32.totalorder %s91, %s107
    %p109 = scmp.eq.s32.totalorder %s15, 0
    %p110 = por %p108, %p109
    %p111 = scmp.le.s32.totalorder 1, %s9
    %p112 = scmp.lt.s32.totalorder %s9, 3
    %p113 = pnand %p111, %p112
    %p114 = pneg %p113
    // Predicated region
    $region9: #{_lambda_.11} parent=5 // pred_check
      _
    $region10: #{_lambda_.11} parent=5 // pred_check_branch
      %116 = sbr.rel (%p113) target = $region12
    $region11: #{_lambda_.11} parent=5 // pred_region
      %s117 = ssub.s32 %s9, 1
      // Predicated region
      $region13: #{_lambda_.11} parent=11 // pred_check
        %p118 = pneg %p56
      $region14: #{_lambda_.11} parent=11 // pred_check_branch
        %120 = sbr.rel (%p118) target = $region16
      $region15: #{_lambda_.11} parent=11 // pred_region
        _
      $region16: #{_lambda_.11} parent=11 // pred_fallthru
        _
      // Predicated region
      $region17: #{_lambda_.11} parent=11 // pred_check
        %p121 = pneg %p77
      $region18: #{_lambda_.11} parent=11 // pred_check_branch
        %123 = sbr.rel (%p121) target = $region20
      $region19: #{_lambda_.11} parent=11 // pred_region
        _
      $region20: #{_lambda_.11} parent=11 // pred_fallthru
        _
    $region12: #{_lambda_.11} parent=5 // pred_fallthru
      _
    %p124 = scmp.lt.s32.totalorder %s9, 2
    // Predicated region
    $region21: #{_lambda_.11} parent=5 // pred_check
      %p125 = pneg %p124
    $region22: #{_lambda_.11} parent=5 // pred_check_branch
      %127 = sbr.rel (%p125) target = $region24
    $region23: #{_lambda_.11} parent=5 // pred_region
      // Predicated region
      $region25: #{_lambda_.11} parent=23 // pred_check
        %p128 = pneg %p29
      $region26: #{_lambda_.11} parent=23 // pred_check_branch
        %130 = sbr.rel (%p128) target = $region28
      $region27: #{_lambda_.11} parent=23 // pred_region
        %s131 = smul.u32 8, %s9
        %p132 = scmp.lt.s32.totalorder %s131, 15
        %s133 = scalar_select %p132, %s131, 15
        %s134 = smul.addr %s133, 4
        %s135 = scalar_lea.vmem %s0, %s134
        %s136 = smul.u32 8, %s9
      $region28: #{_lambda_.11} parent=23 // pred_fallthru
        _
    $region24: #{_lambda_.11} parent=5 // pred_fallthru
      _
    %p137 = scmp.le.s32.totalorder 1, %s9
    %p138 = scmp.lt.s32.totalorder %s9, 3
    %p139 = pnand %p137, %p138
    %p140 = pneg %p139
    // Predicated region
    $region29: #{_lambda_.11} parent=5 // pred_check
      _
    $region30: #{_lambda_.11} parent=5 // pred_check_branch
      %142 = sbr.rel (%p139) target = $region32
    $region31: #{_lambda_.11} parent=5 // pred_region
      %s143 = ssub.s32 %s9, 1
      %s144 = smul.u32 8, %s14
      %p145 = scmp.lt.s32.totalorder %s144, 15
      %s146 = scalar_select %p145, %s144, 15
      %s147 = smul.addr %s146, 4
      %s148 = scalar_lea.vmem %s0, %s147
      %p149 = pneg %p35
      %p150 = pneg %p32
      %p151 = pneg %p56
      %p152 = pneg %p53
      %p153 = pneg %p77
      %p154 = pneg %p74
      %p155 = pneg %p103
      %p156 = pneg %p100
      %s157 = smul.u32 8, %s14
      %p158 = scmp.lt.s32.totalorder %s157, 15
      %s159 = scalar_select %p158, %s157, 15
      %s160 = smul.addr %s159, 8
      %s161 = scalar_lea.vmem %s3, %s160
      %s162 = smul.u32 8, %s14
      %p163 = scmp.lt.s32.totalorder %s162, 15
      %s164 = scalar_select %p163, %s162, 15
      %s165 = smul.addr %s164, 4
      %s166 = scalar_lea.vmem %s0, %s165
      %s167 = smul.u32 8, %s14
      %s168 = smul.u32 8, %s14
      %p169 = scmp.lt.s32.totalorder %s168, 15
      %s170 = scalar_select %p169, %s168, 15
      %s171 = smul.addr %s170, 8
      %s172 = scalar_lea.vmem %s3, %s171
      %s173 = smul.u32 8, %s14
      %v175 = vld [vmem:[%s166] sm:$0xf]
      %v176 = vld [vmem:[%s166 + $0x4] sm:$0xf]
      %v177 = vld [vmem:[%s166 + $0x8] sm:$0xf]
      %v178 = vld [vmem:[%s166 + $0xc] sm:$0xf]
      %v179 = vld [vmem:[%s166 + $0x10] sm:$0xf]
      %v180 = vld [vmem:[%s166 + $0x14] sm:$0xf]
      %v181 = vld [vmem:[%s166 + $0x18] sm:$0xf]
      %v182 = vld [vmem:[%s166 + $0x1c] sm:$0xf]
      %v183 = vld [vmem:[%s1] sm:$0xf]
      %v184 = vld [vmem:[%s1 + $0x4] sm:$0xf]
      %v185 = vld [vmem:[%s1 + $0x8] sm:$0xf]
      %v186 = vld [vmem:[%s1 + $0xc] sm:$0xf]
      %v187 = vld [vmem:[%s1 + $0x10] sm:$0xf]
      %v188 = vld [vmem:[%s1 + $0x14] sm:$0xf]
      %v189 = vld [vmem:[%s1 + $0x18] sm:$0xf]
      %v190 = vld [vmem:[%s1 + $0x1c] sm:$0xf]
      %v191 = vld [vmem:[%s2] sm:$0x1]
      %v193 = vperm.slane %v191, 0
      %v203 = vunpack.c.l.b16 %v175
      %v204 = vunpack.c.l.b16 %v176
      %v205 = vunpack.c.l.b16 %v177
      %v206 = vunpack.c.l.b16 %v178
      %v207 = vunpack.c.l.b16 %v179
      %v208 = vunpack.c.l.b16 %v180
      %v209 = vunpack.c.l.b16 %v181
      %v210 = vunpack.c.l.b16 %v182
      %v211 = vpack.c.b16 %v204, %v203
      %v212 = vpack.c.b16 %v206, %v205
      %v213 = vpack.c.b16 %v208, %v207
      %v214 = vpack.c.b16 %v210, %v209
      %v223 = vunpack.c.l.b16 %v183
      %v224 = vunpack.c.l.b16 %v184
      %v225 = vunpack.c.l.b16 %v185
      %v226 = vunpack.c.l.b16 %v186
      %v227 = vunpack.c.l.b16 %v187
      %v228 = vunpack.c.l.b16 %v188
      %v229 = vunpack.c.l.b16 %v189
      %v230 = vunpack.c.l.b16 %v190
      %v231 = vpack.c.b16 %v224, %v223
      %v232 = vpack.c.b16 %v226, %v225
      %v233 = vpack.c.b16 %v228, %v227
      %v234 = vpack.c.b16 %v230, %v229
      %vm239 = vcmask 523264
      %v241 = vsel %vm239, %v211, 0
      %v244 = vsel %vm239, %v212, 0
      %v247 = vsel %vm239, %v213, 0
      %v250 = vsel %vm239, %v214, 0
      %252 = vmatpush.bf16.msra.mxu0 0
      %253 = vmatpush.bf16.msra.mxu0 0
      %254 = vmatpush.bf16.msra.mxu0 0
      %255 = vmatpush.bf16.msra.mxu0 0
      %256 = vmatpush.bf16.msra.mxu0 %v234
      %257 = vmatpush.bf16.msra.mxu0 %v233
      %258 = vmatpush.bf16.msra.mxu0 %v232
      %259 = vmatpush.bf16.msra.mxu0 %v231
      %260 = vmatmul.bf16.gmra.mxu0 %v241
      %v261 = vpop.f32.mrf.mxu0
      %v262 = vadd.f32 %v193, %v261
      %v263 = vpop.f32.mrf.mxu0
      %v264 = vadd.f32 %v193, %v263
      %265 = vmatmul.bf16.gmra.mxu0 %v244
      %v266 = vpop.f32.mrf.mxu0
      %v267 = vadd.f32 %v193, %v266
      %v268 = vpop.f32.mrf.mxu0
      %v269 = vadd.f32 %v193, %v268
      %270 = vmatmul.bf16.gmra.mxu0 %v247
      %v271 = vpop.f32.mrf.mxu0
      %v272 = vadd.f32 %v193, %v271
      %v273 = vpop.f32.mrf.mxu0
      %v274 = vadd.f32 %v193, %v273
      %275 = vmatmul.bf16.gmra.mxu0 %v250
      %v276 = vpop.f32.mrf.mxu0
      %v277 = vadd.f32 %v193, %v276
      %v278 = vpop.f32.mrf.mxu0
      %v279 = vadd.f32 %v193, %v278
      %280 = vdwg.mxu0
      %281 = vst [vmem:[%s172] sm:$0xff] %v262
      %282 = vst [vmem:[%s172 + $0x8] sm:$0xff] %v264
      %283 = vst [vmem:[%s172 + $0x10] sm:$0xff] %v267
      %284 = vst [vmem:[%s172 + $0x18] sm:$0xff] %v269
      %285 = vst [vmem:[%s172 + $0x20] sm:$0xff] %v272
      %286 = vst [vmem:[%s172 + $0x28] sm:$0xff] %v274
      %287 = vst [vmem:[%s172 + $0x30] sm:$0xff] %v277
      %288 = vst [vmem:[%s172 + $0x38] sm:$0xff] %v279
      %s289 = smul.u32 8, %s14
      %p290 = scmp.lt.s32.totalorder %s289, 15
      %s291 = scalar_select %p290, %s289, 15
      %s292 = smul.addr %s291, 8
      %s293 = scalar_lea.vmem %s3, %s292
      // Predicated region
      $region33: #{_lambda_.11} parent=31 // pred_check
        %p294 = pneg %p100
      $region34: #{_lambda_.11} parent=31 // pred_check_branch
        %296 = sbr.rel (%p294) target = $region36
      $region35: #{_lambda_.11} parent=31 // pred_region
        %s297 = smul.u32 8, %s14
      $region36: #{_lambda_.11} parent=31 // pred_fallthru
        _
    $region32: #{_lambda_.11} parent=5 // pred_fallthru
      _
    %p298 = scmp.le.s32.totalorder 2, %s9
    // Predicated region
    $region37: #{_lambda_.11} parent=5 // pred_check
      %p299 = pneg %p298
    $region38: #{_lambda_.11} parent=5 // pred_check_branch
      %301 = sbr.rel (%p299) target = $region40
    $region39: #{_lambda_.11} parent=5 // pred_region
      %s302 = ssub.s32 %s9, 2
      // Predicated region
      $region41: #{_lambda_.11} parent=39 // pred_check
        %p303 = pneg %p106
      $region42: #{_lambda_.11} parent=39 // pred_check_branch
        %305 = sbr.rel (%p303) target = $region44
      $region43: #{_lambda_.11} parent=39 // pred_region
        %s306 = smul.u32 8, %s15
        %p307 = scmp.lt.s32.totalorder %s306, 15
        %s308 = scalar_select %p307, %s306, 15
        %s309 = smul.addr %s308, 8
        %s310 = scalar_lea.vmem %s3, %s309
      $region44: #{_lambda_.11} parent=39 // pred_fallthru
        _
    $region40: #{_lambda_.11} parent=5 // pred_fallthru
      _
  $region6: #{_lambda_.11} parent=0 // loop_footer
    %s13 = sadd.s32 1, %s9
  $region7: #{_lambda_.11} parent=0 // loop_footer_branch
    %8 = sbr.rel target = $region3
  $region8: #{_lambda_.11} parent=0 // loop_exit
    _

</llo_original>
